<compile_context>
chip_gen: v7x
topology: tpu7x:2x2x1
jax: 0.10.0
libtpu: 0.0.40
codegen_flags: <defaults>
</compile_context>

<pallas_src>
import jax
import jax.numpy as jnp
from jax.experimental import pallas as pl
from jax.experimental.pallas import tpu as pltpu


LANE = 128          # padded lane (feature) width
NEG_SLOPE = 0.2     # GATConv default negative_slope
MASK_VAL = -1e30


# ----------------------------------------------------------------------------
# Fused kernel: 4x (GATConv + ELU)  ->  Linear/ReLU x2  ->  Linear  ->  sigmoid
# ----------------------------------------------------------------------------
def _gat_fused_kernel(x_ref, adj_ref, w_ref, asrc_ref, adst_ref, bias_ref,
                      hmask_ref, mw_ref, mb_ref, out_ref):
    """
    x_ref:     [N, 128]        f32   node features, zero-padded on lanes
    adj_ref:   [N, N]          int8  adj[i, j] = 1 iff edge j -> i (self loops incl.)
    w_ref:     [4, 128, 128]   bf16  per-layer lin weights (zero-padded)
    asrc_ref:  [4, HMAX, 128]  bf16  block-diagonal att_src rows (one row per head)
    adst_ref:  [4, HMAX, 128]  bf16  block-diagonal att_dst rows
    bias_ref:  [4, 1, 128]     f32   per-layer bias (zero-padded)
    hmask_ref: [4, HMAX, 128]  f32   1.0 on head h's output columns, else 0.0
    mw_ref:    [3, 128, 128]   bf16  MLP weights (zero-padded)
    mb_ref:    [3, 1, 128]     f32   MLP biases (zero-padded)
    out_ref:   [N, 128]        f32   sigmoid output in column 0 (lane-dense store)
    """
    n, kp = x_ref.shape
    n_layers = w_ref.shape[0]
    hmax = asrc_ref.shape[1]

    # mask computed once; adjacency travels as int8 (O(N^2) input)
    mask = adj_ref[...].astype(jnp.float32) > 0.0            # [N_dst, N_src] bool

    h = x_ref[...]                                            # [N, Kp] f32

    for l in range(n_layers):                                 # static unroll (4 layers)
        # ---- linear transform, all heads batched on the lane axis (MXU, bf16) ----
        hl = jnp.dot(h.astype(jnp.bfloat16), w_ref[l],
                     preferred_element_type=jnp.float32)      # [N, Kp] f32
        hl_b = hl.astype(jnp.bfloat16)

        # ---- per-head attention scores, already head-major (no transpose) ----
        # s[h, n] = <att_h, hl[n, head-h block]>   via block-diagonal att matrices
        s_src = jnp.einsum('hk,nk->hn', asrc_ref[l], hl_b,
                           preferred_element_type=jnp.float32)  # [H, N_src]
        s_dst = jnp.einsum('hk,nk->hn', adst_ref[l], hl_b,
                           preferred_element_type=jnp.float32)  # [H, N_dst]

        # e[h, i, j] = LeakyReLU(s_dst[h, i] + s_src[h, j])
        e = s_dst[:, :, None] + s_src[:, None, :]             # [H, N, N]
        e = jnp.where(e > 0.0, e, NEG_SLOPE * e)
        e = jnp.where(mask[None, :, :], e, MASK_VAL)

        # ---- softmax over source nodes (masked logits underflow to exact 0) ----
        e = e - jnp.max(e, axis=-1, keepdims=True)
        p = jnp.exp(e)                                        # f32 (v5e-friendly)
        alpha = p * pl.reciprocal(jnp.sum(p, axis=-1, keepdims=True),
                                  approx=True)                # EUP divide

        # ---- aggregate all heads with one batched matmul (shared rhs) ----
        rhs = jnp.broadcast_to(hl_b[None, :, :], (hmax, n, kp))
        agg = jnp.einsum('hij,hjk->hik', alpha.astype(jnp.bfloat16), rhs,
                         preferred_element_type=jnp.float32)  # [H, N, Kp]

        # head-column masks re-assemble the concat(heads) layout, no jnp.concatenate
        hm = hmask_ref[l]                                     # [H, Kp]
        out = agg[0] * hm[0:1, :]
        for hh in range(1, hmax):
            out = out + agg[hh] * hm[hh:hh + 1, :]
        out = out + bias_ref[l]                               # [1, Kp] broadcast

        # ELU (exp only on the clamped negative part -> no throwaway inf)
        h = jnp.where(out > 0.0, out, jnp.exp(jnp.minimum(out, 0.0)) - 1.0)

    # ---- MLP head: Linear -> (Dropout=id) -> ReLU -> Linear -> ReLU -> Linear ----
    h = jnp.dot(h.astype(jnp.bfloat16), mw_ref[0],
                preferred_element_type=jnp.float32) + mb_ref[0]
    h = jnp.maximum(h, 0.0)
    h = jnp.dot(h.astype(jnp.bfloat16), mw_ref[1],
                preferred_element_type=jnp.float32) + mb_ref[1]
    h = jnp.maximum(h, 0.0)
    z = jnp.dot(h.astype(jnp.bfloat16), mw_ref[2],
                preferred_element_type=jnp.float32) + mb_ref[2]

    # sigmoid (exact reciprocal keeps the output strictly within [0, 1])
    out_ref[...] = pl.reciprocal(1.0 + jnp.exp(-z))


# ----------------------------------------------------------------------------
# Parameter packing (zero-pad to lane-dense 128-wide slabs, stack layers)
# ----------------------------------------------------------------------------
def _pad_to(a, shape):
    out = jnp.zeros(shape, a.dtype)
    return out.at[tuple(slice(0, s) for s in a.shape)].set(a)


def pack_params(params):
    gat_layers = params[:4]
    lin_layers = params[4:]
    hmax = max(a_src.shape[0] for (_, a_src, _, _) in gat_layers)

    Ws, Ss, Ds, Bs, Ms = [], [], [], [], []
    for (w, a_src, a_dst, bias) in gat_layers:
        H, C = a_src.shape
        Ws.append(_pad_to(w, (LANE, LANE)).astype(jnp.bfloat16))
        s_mat = jnp.zeros((hmax, LANE), jnp.float32)
        d_mat = jnp.zeros((hmax, LANE), jnp.float32)
        m_mat = jnp.zeros((hmax, LANE), jnp.float32)
        for h in range(H):
            s_mat = s_mat.at[h, h * C:(h + 1) * C].set(a_src[h])
            d_mat = d_mat.at[h, h * C:(h + 1) * C].set(a_dst[h])
            m_mat = m_mat.at[h, h * C:(h + 1) * C].set(1.0)
        Ss.append(s_mat.astype(jnp.bfloat16))
        Ds.append(d_mat.astype(jnp.bfloat16))
        Ms.append(m_mat)
        Bs.append(_pad_to(bias, (1, LANE)))

    MW, MB = [], []
    for (w, b) in lin_layers:
        MW.append(_pad_to(w, (LANE, LANE)).astype(jnp.bfloat16))
        MB.append(_pad_to(b, (1, LANE)))

    return (jnp.stack(Ws), jnp.stack(Ss), jnp.stack(Ds), jnp.stack(Bs),
            jnp.stack(Ms), jnp.stack(MW), jnp.stack(MB))


# ----------------------------------------------------------------------------
# Wrapper: single fused pallas_call, whole problem resident in VMEM
# ----------------------------------------------------------------------------
def gat_forward(x, adj, params, *, hidden=None, heads=None):
    del hidden, heads  # shapes are read from the parameter arrays
    n = x.shape[0]
    xp = _pad_to(x.astype(jnp.float32), (n, LANE))
    adj_i8 = adj.astype(jnp.int8)
    W, ASRC, ADST, BIAS, HMASK, MW, MB = pack_params(params)

    out = pl.pallas_call(
        _gat_fused_kernel,
        out_shape=jax.ShapeDtypeStruct((n, LANE), jnp.float32),
        in_specs=[pl.BlockSpec(memory_space=pltpu.MemorySpace.VMEM)] * 9,
        out_specs=pl.BlockSpec(memory_space=pltpu.MemorySpace.VMEM),
    )(xp, adj_i8, W, ASRC, ADST, BIAS, HMASK, MW, MB)
    return out[:, :1]


# ----------------------------------------------------------------------------
# Deterministic parameter init (shapes from GAT.__init__)
# ----------------------------------------------------------------------------
def init_gat_params(key, in_dim, out_channels, heads):
    k1, k2, k3 = jax.random.split(key, 3)
    scale = 1.0 / jnp.sqrt(jnp.float32(in_dim))
    w = jax.random.uniform(k1, (in_dim, heads * out_channels), jnp.float32,
                           -scale, scale)
    att_src = jax.random.uniform(k2, (heads, out_channels), jnp.float32,
                                 -scale, scale)
    att_dst = jax.random.uniform(k3, (heads, out_channels), jnp.float32,
                                 -scale, scale)
    bias = jnp.zeros((1, heads * out_channels), jnp.float32)
    return w, att_src, att_dst, bias


def init_linear(key, in_dim, out_dim):
    k1, k2 = jax.random.split(key, 2)
    scale = 1.0 / jnp.sqrt(jnp.float32(in_dim))
    w = jax.random.uniform(k1, (in_dim, out_dim), jnp.float32, -scale, scale)
    b = jax.random.uniform(k2, (1, out_dim), jnp.float32, -scale, scale)
    return w, b


if __name__ == "__main__":
    hidden = 8   # hidden_size
    heads = 2
    n_nodes = 16
    in_feat = 10          # GATConv(10, ...) fixes the input feature size
    n_edges = 40

    key = jax.random.PRNGKey(0)
    keys = jax.random.split(key, 12)

    # node features and edge_index (data.x, data.edge_index)
    x = jax.random.normal(keys[0], (n_nodes, in_feat), jnp.float32)
    src = jax.random.randint(keys[1], (n_edges,), 0, n_nodes)
    dst = jax.random.randint(keys[2], (n_edges,), 0, n_nodes)
    edge_index = jnp.stack([src, dst])  # [2, E], messages flow src -> dst

    # dense adjacency mask with self-loops (GATConv add_self_loops=True), int8
    adj = jnp.zeros((n_nodes, n_nodes), jnp.int8)
    adj = adj.at[edge_index[1], edge_index[0]].set(1)
    adj = adj.at[jnp.arange(n_nodes), jnp.arange(n_nodes)].set(1)

    # NOTE: last GATConv uses heads=1, so concat-vs-mean over heads is moot here.
    params = (
        init_gat_params(keys[3], in_feat, hidden, heads),
        init_gat_params(keys[4], hidden * heads, hidden * 2, heads),
        init_gat_params(keys[5], hidden * heads * 2, hidden * 2, heads),
        init_gat_params(keys[6], hidden * heads * 2, hidden, 1),
        init_linear(keys[7], hidden, hidden * 4),
        init_linear(keys[8], hidden * 4, hidden * 4),
        init_linear(keys[9], hidden * 4, 1),
    )

    out = gat_forward(x, adj, params, hidden=hidden, heads=heads)
    out = jax.block_until_ready(out)

    assert out.shape == (n_nodes, 1)
    assert bool(jnp.all(jnp.isfinite(out)))
    assert bool(jnp.all((out >= 0.0) & (out <= 1.0)))  # sigmoid output
    print("KERNEL_OK")
</pallas_src>

<mosaic_0001>
module attributes {stable_mosaic.version = 11 : i64} {
  func.func @_gat_fused_kernel(%arg0: memref<16x128xf32, #tpu.memory_space<vmem>>, %arg1: memref<16x16xi8, #tpu.memory_space<vmem>>, %arg2: memref<4x128x128xbf16, #tpu.memory_space<vmem>>, %arg3: memref<4x2x128xbf16, #tpu.memory_space<vmem>>, %arg4: memref<4x2x128xbf16, #tpu.memory_space<vmem>>, %arg5: memref<4x1x128xf32, #tpu.memory_space<vmem>>, %arg6: memref<4x2x128xf32, #tpu.memory_space<vmem>>, %arg7: memref<3x128x128xbf16, #tpu.memory_space<vmem>>, %arg8: memref<3x1x128xf32, #tpu.memory_space<vmem>>, %arg9: memref<16x128xf32, #tpu.memory_space<vmem>>) attributes {dimension_semantics = [], scalar_prefetch = 0 : i64, scratch_operands = 0 : i64, tpu.core_type = #tpu.core_type<tc>} {
    %c0 = arith.constant 0 : index
    %c0_0 = arith.constant 0 : index
    %0 = vector.load %arg1[%c0, %c0_0] : memref<16x16xi8, #tpu.memory_space<vmem>>, vector<16x16xi8>
    %1 = arith.sitofp %0 : vector<16x16xi8> to vector<16x16xf32>
    %cst = arith.constant 0.000000e+00 : f32
    %2 = vector.broadcast %cst : f32 to vector<16x16xf32>
    %3 = arith.cmpf ogt, %1, %2 : vector<16x16xf32>
    %c0_1 = arith.constant 0 : index
    %c0_2 = arith.constant 0 : index
    %4 = vector.load %arg0[%c0_1, %c0_2] : memref<16x128xf32, #tpu.memory_space<vmem>>, vector<16x128xf32>
    %5 = arith.truncf %4 : vector<16x128xf32> to vector<16x128xbf16>
    %c0_3 = arith.constant 0 : index
    %c0_4 = arith.constant 0 : index
    %c0_5 = arith.constant 0 : index
    %6 = vector.load %arg2[%c0_3, %c0_4, %c0_5] : memref<4x128x128xbf16, #tpu.memory_space<vmem>>, vector<1x128x128xbf16>
    %7 = vector.shape_cast %6 : vector<1x128x128xbf16> to vector<128x128xbf16>
    %cst_6 = arith.constant dense<0.000000e+00> : vector<16x128xf32>
    %8 = tpu.matmul %5, %7, %cst_6 {dimension_numbers = #tpu.dot_dimension_numbers<[1], [0], [0], [1], [0, 0, 1, 1], [], []>} : vector<16x128xbf16>, vector<128x128xbf16>, vector<16x128xf32> -> vector<16x128xf32>
    %9 = arith.truncf %8 : vector<16x128xf32> to vector<16x128xbf16>
    %c0_7 = arith.constant 0 : index
    %c0_8 = arith.constant 0 : index
    %c0_9 = arith.constant 0 : index
    %10 = vector.load %arg3[%c0_7, %c0_8, %c0_9] : memref<4x2x128xbf16, #tpu.memory_space<vmem>>, vector<1x2x128xbf16>
    %11 = vector.shape_cast %10 : vector<1x2x128xbf16> to vector<2x128xbf16>
    "tpu.trace_start"() <{level = 10 : i32, message = "hk,nk->hn"}> : () -> ()
    %cst_10 = arith.constant dense<0.000000e+00> : vector<2x16xf32>
    %12 = tpu.matmul %11, %9, %cst_10 {dimension_numbers = #tpu.dot_dimension_numbers<[1], [1], [0], [0], [0, 0, 1, 0], [], []>} : vector<2x128xbf16>, vector<16x128xbf16>, vector<2x16xf32> -> vector<2x16xf32>
    "tpu.trace_stop"() : () -> ()
    %c0_11 = arith.constant 0 : index
    %c0_12 = arith.constant 0 : index
    %c0_13 = arith.constant 0 : index
    %13 = vector.load %arg4[%c0_11, %c0_12, %c0_13] : memref<4x2x128xbf16, #tpu.memory_space<vmem>>, vector<1x2x128xbf16>
    %14 = vector.shape_cast %13 : vector<1x2x128xbf16> to vector<2x128xbf16>
    "tpu.trace_start"() <{level = 10 : i32, message = "hk,nk->hn"}> : () -> ()
    %cst_14 = arith.constant dense<0.000000e+00> : vector<2x16xf32>
    %15 = tpu.matmul %14, %9, %cst_14 {dimension_numbers = #tpu.dot_dimension_numbers<[1], [1], [0], [0], [0, 0, 1, 0], [], []>} : vector<2x128xbf16>, vector<16x128xbf16>, vector<2x16xf32> -> vector<2x16xf32>
    "tpu.trace_stop"() : () -> ()
    %16 = vector.shape_cast %15 : vector<2x16xf32> to vector<2x16x1xf32>
    %17 = vector.shape_cast %12 : vector<2x16xf32> to vector<2x1x16xf32>
    %18 = vector.broadcast %16 : vector<2x16x1xf32> to vector<2x16x16xf32>
    %19 = vector.broadcast %17 : vector<2x1x16xf32> to vector<2x16x16xf32>
    %20 = arith.addf %18, %19 : vector<2x16x16xf32>
    %cst_15 = arith.constant 0.000000e+00 : f32
    %21 = vector.broadcast %cst_15 : f32 to vector<2x16x16xf32>
    %22 = arith.cmpf ogt, %20, %21 : vector<2x16x16xf32>
    %cst_16 = arith.constant 2.000000e-01 : f32
    %23 = vector.broadcast %cst_16 : f32 to vector<2x16x16xf32>
    %24 = arith.mulf %23, %20 : vector<2x16x16xf32>
    %25 = arith.select %22, %20, %24 : vector<2x16x16xi1>, vector<2x16x16xf32>
    %26 = vector.shape_cast %3 : vector<16x16xi1> to vector<1x16x16xi1>
    %cst_17 = arith.constant -1.000000e+30 : f32
    %27 = vector.shape_cast %26 : vector<1x16x16xi1> to vector<1x16x16xi1>
    %28 = vector.broadcast %27 : vector<1x16x16xi1> to vector<2x16x16xi1>
    %29 = vector.broadcast %cst_17 : f32 to vector<2x16x16xf32>
    %30 = arith.select %28, %25, %29 : vector<2x16x16xi1>, vector<2x16x16xf32>
    %cst_18 = arith.constant dense<0xFF800000> : vector<2x16xf32>
    %31 = vector.multi_reduction <maximumf>, %30, %cst_18 [2] : vector<2x16x16xf32> to vector<2x16xf32>
    %32 = vector.shape_cast %31 : vector<2x16xf32> to vector<2x16x1xf32>
    %33 = vector.broadcast %32 : vector<2x16x1xf32> to vector<2x16x16xf32>
    %34 = arith.subf %30, %33 : vector<2x16x16xf32>
    %35 = math.exp %34 : vector<2x16x16xf32>
    %cst_19 = arith.constant dense<0.000000e+00> : vector<2x16xf32>
    %36 = vector.multi_reduction <add>, %35, %cst_19 [2] : vector<2x16x16xf32> to vector<2x16xf32>
    %37 = vector.shape_cast %36 : vector<2x16xf32> to vector<2x16x1xf32>
    %38 = tpu.reciprocal %37 {approx = true} : vector<2x16x1xf32> -> vector<2x16x1xf32>
    %39 = vector.broadcast %38 : vector<2x16x1xf32> to vector<2x16x16xf32>
    %40 = arith.mulf %35, %39 : vector<2x16x16xf32>
    %41 = vector.shape_cast %9 : vector<16x128xbf16> to vector<1x16x128xbf16>
    %42 = vector.shape_cast %41 : vector<1x16x128xbf16> to vector<1x16x128xbf16>
    %43 = vector.broadcast %42 : vector<1x16x128xbf16> to vector<2x16x128xbf16>
    %44 = arith.truncf %40 : vector<2x16x16xf32> to vector<2x16x16xbf16>
    "tpu.trace_start"() <{level = 10 : i32, message = "hij,hjk->hik"}> : () -> ()
    %cst_20 = arith.constant dense<0.000000e+00> : vector<2x16x128xf32>
    %45 = tpu.matmul %44, %43, %cst_20 {dimension_numbers = #tpu.dot_dimension_numbers<[2], [1], [1], [2], [0, 0, 0, 1, 1, 2], [0], [0]>} : vector<2x16x16xbf16>, vector<2x16x128xbf16>, vector<2x16x128xf32> -> vector<2x16x128xf32>
    "tpu.trace_stop"() : () -> ()
    %c0_21 = arith.constant 0 : index
    %c0_22 = arith.constant 0 : index
    %c0_23 = arith.constant 0 : index
    %46 = vector.load %arg6[%c0_21, %c0_22, %c0_23] : memref<4x2x128xf32, #tpu.memory_space<vmem>>, vector<1x2x128xf32>
    %47 = vector.shape_cast %46 : vector<1x2x128xf32> to vector<2x128xf32>
    %48 = vector.extract_strided_slice %45 {offsets = [0, 0, 0], sizes = [1, 16, 128], strides = [1, 1, 1]} : vector<2x16x128xf32> to vector<1x16x128xf32>
    %49 = vector.shape_cast %48 : vector<1x16x128xf32> to vector<16x128xf32>
    %50 = vector.extract_strided_slice %47 {offsets = [0, 0], sizes = [1, 128], strides = [1, 1]} : vector<2x128xf32> to vector<1x128xf32>
    %51 = vector.broadcast %50 : vector<1x128xf32> to vector<16x128xf32>
    %52 = arith.mulf %49, %51 : vector<16x128xf32>
    %53 = vector.extract_strided_slice %45 {offsets = [1, 0, 0], sizes = [1, 16, 128], strides = [1, 1, 1]} : vector<2x16x128xf32> to vector<1x16x128xf32>
    %54 = vector.shape_cast %53 : vector<1x16x128xf32> to vector<16x128xf32>
    %55 = vector.extract_strided_slice %47 {offsets = [1, 0], sizes = [1, 128], strides = [1, 1]} : vector<2x128xf32> to vector<1x128xf32>
    %56 = vector.broadcast %55 : vector<1x128xf32> to vector<16x128xf32>
    %57 = arith.mulf %54, %56 : vector<16x128xf32>
    %58 = arith.addf %52, %57 : vector<16x128xf32>
    %c0_24 = arith.constant 0 : index
    %c0_25 = arith.constant 0 : index
    %c0_26 = arith.constant 0 : index
    %59 = vector.load %arg5[%c0_24, %c0_25, %c0_26] : memref<4x1x128xf32, #tpu.memory_space<vmem>>, vector<1x1x128xf32>
    %60 = vector.shape_cast %59 : vector<1x1x128xf32> to vector<1x128xf32>
    %61 = vector.broadcast %60 : vector<1x128xf32> to vector<16x128xf32>
    %62 = arith.addf %58, %61 : vector<16x128xf32>
    %cst_27 = arith.constant 0.000000e+00 : f32
    %63 = vector.broadcast %cst_27 : f32 to vector<16x128xf32>
    %64 = arith.cmpf ogt, %62, %63 : vector<16x128xf32>
    %cst_28 = arith.constant 0.000000e+00 : f32
    %65 = vector.broadcast %cst_28 : f32 to vector<16x128xf32>
    %66 = arith.minimumf %62, %65 : vector<16x128xf32>
    %67 = math.exp %66 : vector<16x128xf32>
    %cst_29 = arith.constant 1.000000e+00 : f32
    %68 = vector.broadcast %cst_29 : f32 to vector<16x128xf32>
    %69 = arith.subf %67, %68 : vector<16x128xf32>
    %70 = arith.select %64, %62, %69 : vector<16x128xi1>, vector<16x128xf32>
    %71 = arith.truncf %70 : vector<16x128xf32> to vector<16x128xbf16>
    %c1 = arith.constant 1 : index
    %c0_30 = arith.constant 0 : index
    %c0_31 = arith.constant 0 : index
    %72 = vector.load %arg2[%c1, %c0_30, %c0_31] : memref<4x128x128xbf16, #tpu.memory_space<vmem>>, vector<1x128x128xbf16>
    %73 = vector.shape_cast %72 : vector<1x128x128xbf16> to vector<128x128xbf16>
    %cst_32 = arith.constant dense<0.000000e+00> : vector<16x128xf32>
    %74 = tpu.matmul %71, %73, %cst_32 {dimension_numbers = #tpu.dot_dimension_numbers<[1], [0], [0], [1], [0, 0, 1, 1], [], []>} : vector<16x128xbf16>, vector<128x128xbf16>, vector<16x128xf32> -> vector<16x128xf32>
    %75 = arith.truncf %74 : vector<16x128xf32> to vector<16x128xbf16>
    %c1_33 = arith.constant 1 : index
    %c0_34 = arith.constant 0 : index
    %c0_35 = arith.constant 0 : index
    %76 = vector.load %arg3[%c1_33, %c0_34, %c0_35] : memref<4x2x128xbf16, #tpu.memory_space<vmem>>, vector<1x2x128xbf16>
    %77 = vector.shape_cast %76 : vector<1x2x128xbf16> to vector<2x128xbf16>
    "tpu.trace_start"() <{level = 10 : i32, message = "hk,nk->hn"}> : () -> ()
    %cst_36 = arith.constant dense<0.000000e+00> : vector<2x16xf32>
    %78 = tpu.matmul %77, %75, %cst_36 {dimension_numbers = #tpu.dot_dimension_numbers<[1], [1], [0], [0], [0, 0, 1, 0], [], []>} : vector<2x128xbf16>, vector<16x128xbf16>, vector<2x16xf32> -> vector<2x16xf32>
    "tpu.trace_stop"() : () -> ()
    %c1_37 = arith.constant 1 : index
    %c0_38 = arith.constant 0 : index
    %c0_39 = arith.constant 0 : index
    %79 = vector.load %arg4[%c1_37, %c0_38, %c0_39] : memref<4x2x128xbf16, #tpu.memory_space<vmem>>, vector<1x2x128xbf16>
    %80 = vector.shape_cast %79 : vector<1x2x128xbf16> to vector<2x128xbf16>
    "tpu.trace_start"() <{level = 10 : i32, message = "hk,nk->hn"}> : () -> ()
    %cst_40 = arith.constant dense<0.000000e+00> : vector<2x16xf32>
    %81 = tpu.matmul %80, %75, %cst_40 {dimension_numbers = #tpu.dot_dimension_numbers<[1], [1], [0], [0], [0, 0, 1, 0], [], []>} : vector<2x128xbf16>, vector<16x128xbf16>, vector<2x16xf32> -> vector<2x16xf32>
    "tpu.trace_stop"() : () -> ()
    %82 = vector.shape_cast %81 : vector<2x16xf32> to vector<2x16x1xf32>
    %83 = vector.shape_cast %78 : vector<2x16xf32> to vector<2x1x16xf32>
    %84 = vector.broadcast %82 : vector<2x16x1xf32> to vector<2x16x16xf32>
    %85 = vector.broadcast %83 : vector<2x1x16xf32> to vector<2x16x16xf32>
    %86 = arith.addf %84, %85 : vector<2x16x16xf32>
    %cst_41 = arith.constant 0.000000e+00 : f32
    %87 = vector.broadcast %cst_41 : f32 to vector<2x16x16xf32>
    %88 = arith.cmpf ogt, %86, %87 : vector<2x16x16xf32>
    %cst_42 = arith.constant 2.000000e-01 : f32
    %89 = vector.broadcast %cst_42 : f32 to vector<2x16x16xf32>
    %90 = arith.mulf %89, %86 : vector<2x16x16xf32>
    %91 = arith.select %88, %86, %90 : vector<2x16x16xi1>, vector<2x16x16xf32>
    %92 = vector.shape_cast %3 : vector<16x16xi1> to vector<1x16x16xi1>
    %cst_43 = arith.constant -1.000000e+30 : f32
    %93 = vector.shape_cast %92 : vector<1x16x16xi1> to vector<1x16x16xi1>
    %94 = vector.broadcast %93 : vector<1x16x16xi1> to vector<2x16x16xi1>
    %95 = vector.broadcast %cst_43 : f32 to vector<2x16x16xf32>
    %96 = arith.select %94, %91, %95 : vector<2x16x16xi1>, vector<2x16x16xf32>
    %cst_44 = arith.constant dense<0xFF800000> : vector<2x16xf32>
    %97 = vector.multi_reduction <maximumf>, %96, %cst_44 [2] : vector<2x16x16xf32> to vector<2x16xf32>
    %98 = vector.shape_cast %97 : vector<2x16xf32> to vector<2x16x1xf32>
    %99 = vector.broadcast %98 : vector<2x16x1xf32> to vector<2x16x16xf32>
    %100 = arith.subf %96, %99 : vector<2x16x16xf32>
    %101 = math.exp %100 : vector<2x16x16xf32>
    %cst_45 = arith.constant dense<0.000000e+00> : vector<2x16xf32>
    %102 = vector.multi_reduction <add>, %101, %cst_45 [2] : vector<2x16x16xf32> to vector<2x16xf32>
    %103 = vector.shape_cast %102 : vector<2x16xf32> to vector<2x16x1xf32>
    %104 = tpu.reciprocal %103 {approx = true} : vector<2x16x1xf32> -> vector<2x16x1xf32>
    %105 = vector.broadcast %104 : vector<2x16x1xf32> to vector<2x16x16xf32>
    %106 = arith.mulf %101, %105 : vector<2x16x16xf32>
    %107 = vector.shape_cast %75 : vector<16x128xbf16> to vector<1x16x128xbf16>
    %108 = vector.shape_cast %107 : vector<1x16x128xbf16> to vector<1x16x128xbf16>
    %109 = vector.broadcast %108 : vector<1x16x128xbf16> to vector<2x16x128xbf16>
    %110 = arith.truncf %106 : vector<2x16x16xf32> to vector<2x16x16xbf16>
    "tpu.trace_start"() <{level = 10 : i32, message = "hij,hjk->hik"}> : () -> ()
    %cst_46 = arith.constant dense<0.000000e+00> : vector<2x16x128xf32>
    %111 = tpu.matmul %110, %109, %cst_46 {dimension_numbers = #tpu.dot_dimension_numbers<[2], [1], [1], [2], [0, 0, 0, 1, 1, 2], [0], [0]>} : vector<2x16x16xbf16>, vector<2x16x128xbf16>, vector<2x16x128xf32> -> vector<2x16x128xf32>
    "tpu.trace_stop"() : () -> ()
    %c1_47 = arith.constant 1 : index
    %c0_48 = arith.constant 0 : index
    %c0_49 = arith.constant 0 : index
    %112 = vector.load %arg6[%c1_47, %c0_48, %c0_49] : memref<4x2x128xf32, #tpu.memory_space<vmem>>, vector<1x2x128xf32>
    %113 = vector.shape_cast %112 : vector<1x2x128xf32> to vector<2x128xf32>
    %114 = vector.extract_strided_slice %111 {offsets = [0, 0, 0], sizes = [1, 16, 128], strides = [1, 1, 1]} : vector<2x16x128xf32> to vector<1x16x128xf32>
    %115 = vector.shape_cast %114 : vector<1x16x128xf32> to vector<16x128xf32>
    %116 = vector.extract_strided_slice %113 {offsets = [0, 0], sizes = [1, 128], strides = [1, 1]} : vector<2x128xf32> to vector<1x128xf32>
    %117 = vector.broadcast %116 : vector<1x128xf32> to vector<16x128xf32>
    %118 = arith.mulf %115, %117 : vector<16x128xf32>
    %119 = vector.extract_strided_slice %111 {offsets = [1, 0, 0], sizes = [1, 16, 128], strides = [1, 1, 1]} : vector<2x16x128xf32> to vector<1x16x128xf32>
    %120 = vector.shape_cast %119 : vector<1x16x128xf32> to vector<16x128xf32>
    %121 = vector.extract_strided_slice %113 {offsets = [1, 0], sizes = [1, 128], strides = [1, 1]} : vector<2x128xf32> to vector<1x128xf32>
    %122 = vector.broadcast %121 : vector<1x128xf32> to vector<16x128xf32>
    %123 = arith.mulf %120, %122 : vector<16x128xf32>
    %124 = arith.addf %118, %123 : vector<16x128xf32>
    %c1_50 = arith.constant 1 : index
    %c0_51 = arith.constant 0 : index
    %c0_52 = arith.constant 0 : index
    %125 = vector.load %arg5[%c1_50, %c0_51, %c0_52] : memref<4x1x128xf32, #tpu.memory_space<vmem>>, vector<1x1x128xf32>
    %126 = vector.shape_cast %125 : vector<1x1x128xf32> to vector<1x128xf32>
    %127 = vector.broadcast %126 : vector<1x128xf32> to vector<16x128xf32>
    %128 = arith.addf %124, %127 : vector<16x128xf32>
    %cst_53 = arith.constant 0.000000e+00 : f32
    %129 = vector.broadcast %cst_53 : f32 to vector<16x128xf32>
    %130 = arith.cmpf ogt, %128, %129 : vector<16x128xf32>
    %cst_54 = arith.constant 0.000000e+00 : f32
    %131 = vector.broadcast %cst_54 : f32 to vector<16x128xf32>
    %132 = arith.minimumf %128, %131 : vector<16x128xf32>
    %133 = math.exp %132 : vector<16x128xf32>
    %cst_55 = arith.constant 1.000000e+00 : f32
    %134 = vector.broadcast %cst_55 : f32 to vector<16x128xf32>
    %135 = arith.subf %133, %134 : vector<16x128xf32>
    %136 = arith.select %130, %128, %135 : vector<16x128xi1>, vector<16x128xf32>
    %137 = arith.truncf %136 : vector<16x128xf32> to vector<16x128xbf16>
    %c2 = arith.constant 2 : index
    %c0_56 = arith.constant 0 : index
    %c0_57 = arith.constant 0 : index
    %138 = vector.load %arg2[%c2, %c0_56, %c0_57] : memref<4x128x128xbf16, #tpu.memory_space<vmem>>, vector<1x128x128xbf16>
    %139 = vector.shape_cast %138 : vector<1x128x128xbf16> to vector<128x128xbf16>
    %cst_58 = arith.constant dense<0.000000e+00> : vector<16x128xf32>
    %140 = tpu.matmul %137, %139, %cst_58 {dimension_numbers = #tpu.dot_dimension_numbers<[1], [0], [0], [1], [0, 0, 1, 1], [], []>} : vector<16x128xbf16>, vector<128x128xbf16>, vector<16x128xf32> -> vector<16x128xf32>
    %141 = arith.truncf %140 : vector<16x128xf32> to vector<16x128xbf16>
    %c2_59 = arith.constant 2 : index
    %c0_60 = arith.constant 0 : index
    %c0_61 = arith.constant 0 : index
    %142 = vector.load %arg3[%c2_59, %c0_60, %c0_61] : memref<4x2x128xbf16, #tpu.memory_space<vmem>>, vector<1x2x128xbf16>
    %143 = vector.shape_cast %142 : vector<1x2x128xbf16> to vector<2x128xbf16>
    "tpu.trace_start"() <{level = 10 : i32, message = "hk,nk->hn"}> : () -> ()
    %cst_62 = arith.constant dense<0.000000e+00> : vector<2x16xf32>
    %144 = tpu.matmul %143, %141, %cst_62 {dimension_numbers = #tpu.dot_dimension_numbers<[1], [1], [0], [0], [0, 0, 1, 0], [], []>} : vector<2x128xbf16>, vector<16x128xbf16>, vector<2x16xf32> -> vector<2x16xf32>
    "tpu.trace_stop"() : () -> ()
    %c2_63 = arith.constant 2 : index
    %c0_64 = arith.constant 0 : index
    %c0_65 = arith.constant 0 : index
    %145 = vector.load %arg4[%c2_63, %c0_64, %c0_65] : memref<4x2x128xbf16, #tpu.memory_space<vmem>>, vector<1x2x128xbf16>
    %146 = vector.shape_cast %145 : vector<1x2x128xbf16> to vector<2x128xbf16>
    "tpu.trace_start"() <{level = 10 : i32, message = "hk,nk->hn"}> : () -> ()
    %cst_66 = arith.constant dense<0.000000e+00> : vector<2x16xf32>
    %147 = tpu.matmul %146, %141, %cst_66 {dimension_numbers = #tpu.dot_dimension_numbers<[1], [1], [0], [0], [0, 0, 1, 0], [], []>} : vector<2x128xbf16>, vector<16x128xbf16>, vector<2x16xf32> -> vector<2x16xf32>
    "tpu.trace_stop"() : () -> ()
    %148 = vector.shape_cast %147 : vector<2x16xf32> to vector<2x16x1xf32>
    %149 = vector.shape_cast %144 : vector<2x16xf32> to vector<2x1x16xf32>
    %150 = vector.broadcast %148 : vector<2x16x1xf32> to vector<2x16x16xf32>
    %151 = vector.broadcast %149 : vector<2x1x16xf32> to vector<2x16x16xf32>
    %152 = arith.addf %150, %151 : vector<2x16x16xf32>
    %cst_67 = arith.constant 0.000000e+00 : f32
    %153 = vector.broadcast %cst_67 : f32 to vector<2x16x16xf32>
    %154 = arith.cmpf ogt, %152, %153 : vector<2x16x16xf32>
    %cst_68 = arith.constant 2.000000e-01 : f32
    %155 = vector.broadcast %cst_68 : f32 to vector<2x16x16xf32>
    %156 = arith.mulf %155, %152 : vector<2x16x16xf32>
    %157 = arith.select %154, %152, %156 : vector<2x16x16xi1>, vector<2x16x16xf32>
    %158 = vector.shape_cast %3 : vector<16x16xi1> to vector<1x16x16xi1>
    %cst_69 = arith.constant -1.000000e+30 : f32
    %159 = vector.shape_cast %158 : vector<1x16x16xi1> to vector<1x16x16xi1>
    %160 = vector.broadcast %159 : vector<1x16x16xi1> to vector<2x16x16xi1>
    %161 = vector.broadcast %cst_69 : f32 to vector<2x16x16xf32>
    %162 = arith.select %160, %157, %161 : vector<2x16x16xi1>, vector<2x16x16xf32>
    %cst_70 = arith.constant dense<0xFF800000> : vector<2x16xf32>
    %163 = vector.multi_reduction <maximumf>, %162, %cst_70 [2] : vector<2x16x16xf32> to vector<2x16xf32>
    %164 = vector.shape_cast %163 : vector<2x16xf32> to vector<2x16x1xf32>
    %165 = vector.broadcast %164 : vector<2x16x1xf32> to vector<2x16x16xf32>
    %166 = arith.subf %162, %165 : vector<2x16x16xf32>
    %167 = math.exp %166 : vector<2x16x16xf32>
    %cst_71 = arith.constant dense<0.000000e+00> : vector<2x16xf32>
    %168 = vector.multi_reduction <add>, %167, %cst_71 [2] : vector<2x16x16xf32> to vector<2x16xf32>
    %169 = vector.shape_cast %168 : vector<2x16xf32> to vector<2x16x1xf32>
    %170 = tpu.reciprocal %169 {approx = true} : vector<2x16x1xf32> -> vector<2x16x1xf32>
    %171 = vector.broadcast %170 : vector<2x16x1xf32> to vector<2x16x16xf32>
    %172 = arith.mulf %167, %171 : vector<2x16x16xf32>
    %173 = vector.shape_cast %141 : vector<16x128xbf16> to vector<1x16x128xbf16>
    %174 = vector.shape_cast %173 : vector<1x16x128xbf16> to vector<1x16x128xbf16>
    %175 = vector.broadcast %174 : vector<1x16x128xbf16> to vector<2x16x128xbf16>
    %176 = arith.truncf %172 : vector<2x16x16xf32> to vector<2x16x16xbf16>
    "tpu.trace_start"() <{level = 10 : i32, message = "hij,hjk->hik"}> : () -> ()
    %cst_72 = arith.constant dense<0.000000e+00> : vector<2x16x128xf32>
    %177 = tpu.matmul %176, %175, %cst_72 {dimension_numbers = #tpu.dot_dimension_numbers<[2], [1], [1], [2], [0, 0, 0, 1, 1, 2], [0], [0]>} : vector<2x16x16xbf16>, vector<2x16x128xbf16>, vector<2x16x128xf32> -> vector<2x16x128xf32>
    "tpu.trace_stop"() : () -> ()
    %c2_73 = arith.constant 2 : index
    %c0_74 = arith.constant 0 : index
    %c0_75 = arith.constant 0 : index
    %178 = vector.load %arg6[%c2_73, %c0_74, %c0_75] : memref<4x2x128xf32, #tpu.memory_space<vmem>>, vector<1x2x128xf32>
    %179 = vector.shape_cast %178 : vector<1x2x128xf32> to vector<2x128xf32>
    %180 = vector.extract_strided_slice %177 {offsets = [0, 0, 0], sizes = [1, 16, 128], strides = [1, 1, 1]} : vector<2x16x128xf32> to vector<1x16x128xf32>
    %181 = vector.shape_cast %180 : vector<1x16x128xf32> to vector<16x128xf32>
    %182 = vector.extract_strided_slice %179 {offsets = [0, 0], sizes = [1, 128], strides = [1, 1]} : vector<2x128xf32> to vector<1x128xf32>
    %183 = vector.broadcast %182 : vector<1x128xf32> to vector<16x128xf32>
    %184 = arith.mulf %181, %183 : vector<16x128xf32>
    %185 = vector.extract_strided_slice %177 {offsets = [1, 0, 0], sizes = [1, 16, 128], strides = [1, 1, 1]} : vector<2x16x128xf32> to vector<1x16x128xf32>
    %186 = vector.shape_cast %185 : vector<1x16x128xf32> to vector<16x128xf32>
    %187 = vector.extract_strided_slice %179 {offsets = [1, 0], sizes = [1, 128], strides = [1, 1]} : vector<2x128xf32> to vector<1x128xf32>
    %188 = vector.broadcast %187 : vector<1x128xf32> to vector<16x128xf32>
    %189 = arith.mulf %186, %188 : vector<16x128xf32>
    %190 = arith.addf %184, %189 : vector<16x128xf32>
    %c2_76 = arith.constant 2 : index
    %c0_77 = arith.constant 0 : index
    %c0_78 = arith.constant 0 : index
    %191 = vector.load %arg5[%c2_76, %c0_77, %c0_78] : memref<4x1x128xf32, #tpu.memory_space<vmem>>, vector<1x1x128xf32>
    %192 = vector.shape_cast %191 : vector<1x1x128xf32> to vector<1x128xf32>
    %193 = vector.broadcast %192 : vector<1x128xf32> to vector<16x128xf32>
    %194 = arith.addf %190, %193 : vector<16x128xf32>
    %cst_79 = arith.constant 0.000000e+00 : f32
    %195 = vector.broadcast %cst_79 : f32 to vector<16x128xf32>
    %196 = arith.cmpf ogt, %194, %195 : vector<16x128xf32>
    %cst_80 = arith.constant 0.000000e+00 : f32
    %197 = vector.broadcast %cst_80 : f32 to vector<16x128xf32>
    %198 = arith.minimumf %194, %197 : vector<16x128xf32>
    %199 = math.exp %198 : vector<16x128xf32>
    %cst_81 = arith.constant 1.000000e+00 : f32
    %200 = vector.broadcast %cst_81 : f32 to vector<16x128xf32>
    %201 = arith.subf %199, %200 : vector<16x128xf32>
    %202 = arith.select %196, %194, %201 : vector<16x128xi1>, vector<16x128xf32>
    %203 = arith.truncf %202 : vector<16x128xf32> to vector<16x128xbf16>
    %c3 = arith.constant 3 : index
    %c0_82 = arith.constant 0 : index
    %c0_83 = arith.constant 0 : index
    %204 = vector.load %arg2[%c3, %c0_82, %c0_83] : memref<4x128x128xbf16, #tpu.memory_space<vmem>>, vector<1x128x128xbf16>
    %205 = vector.shape_cast %204 : vector<1x128x128xbf16> to vector<128x128xbf16>
    %cst_84 = arith.constant dense<0.000000e+00> : vector<16x128xf32>
    %206 = tpu.matmul %203, %205, %cst_84 {dimension_numbers = #tpu.dot_dimension_numbers<[1], [0], [0], [1], [0, 0, 1, 1], [], []>} : vector<16x128xbf16>, vector<128x128xbf16>, vector<16x128xf32> -> vector<16x128xf32>
    %207 = arith.truncf %206 : vector<16x128xf32> to vector<16x128xbf16>
    %c3_85 = arith.constant 3 : index
    %c0_86 = arith.constant 0 : index
    %c0_87 = arith.constant 0 : index
    %208 = vector.load %arg3[%c3_85, %c0_86, %c0_87] : memref<4x2x128xbf16, #tpu.memory_space<vmem>>, vector<1x2x128xbf16>
    %209 = vector.shape_cast %208 : vector<1x2x128xbf16> to vector<2x128xbf16>
    "tpu.trace_start"() <{level = 10 : i32, message = "hk,nk->hn"}> : () -> ()
    %cst_88 = arith.constant dense<0.000000e+00> : vector<2x16xf32>
    %210 = tpu.matmul %209, %207, %cst_88 {dimension_numbers = #tpu.dot_dimension_numbers<[1], [1], [0], [0], [0, 0, 1, 0], [], []>} : vector<2x128xbf16>, vector<16x128xbf16>, vector<2x16xf32> -> vector<2x16xf32>
    "tpu.trace_stop"() : () -> ()
    %c3_89 = arith.constant 3 : index
    %c0_90 = arith.constant 0 : index
    %c0_91 = arith.constant 0 : index
    %211 = vector.load %arg4[%c3_89, %c0_90, %c0_91] : memref<4x2x128xbf16, #tpu.memory_space<vmem>>, vector<1x2x128xbf16>
    %212 = vector.shape_cast %211 : vector<1x2x128xbf16> to vector<2x128xbf16>
    "tpu.trace_start"() <{level = 10 : i32, message = "hk,nk->hn"}> : () -> ()
    %cst_92 = arith.constant dense<0.000000e+00> : vector<2x16xf32>
    %213 = tpu.matmul %212, %207, %cst_92 {dimension_numbers = #tpu.dot_dimension_numbers<[1], [1], [0], [0], [0, 0, 1, 0], [], []>} : vector<2x128xbf16>, vector<16x128xbf16>, vector<2x16xf32> -> vector<2x16xf32>
    "tpu.trace_stop"() : () -> ()
    %214 = vector.shape_cast %213 : vector<2x16xf32> to vector<2x16x1xf32>
    %215 = vector.shape_cast %210 : vector<2x16xf32> to vector<2x1x16xf32>
    %216 = vector.broadcast %214 : vector<2x16x1xf32> to vector<2x16x16xf32>
    %217 = vector.broadcast %215 : vector<2x1x16xf32> to vector<2x16x16xf32>
    %218 = arith.addf %216, %217 : vector<2x16x16xf32>
    %cst_93 = arith.constant 0.000000e+00 : f32
    %219 = vector.broadcast %cst_93 : f32 to vector<2x16x16xf32>
    %220 = arith.cmpf ogt, %218, %219 : vector<2x16x16xf32>
    %cst_94 = arith.constant 2.000000e-01 : f32
    %221 = vector.broadcast %cst_94 : f32 to vector<2x16x16xf32>
    %222 = arith.mulf %221, %218 : vector<2x16x16xf32>
    %223 = arith.select %220, %218, %222 : vector<2x16x16xi1>, vector<2x16x16xf32>
    %224 = vector.shape_cast %3 : vector<16x16xi1> to vector<1x16x16xi1>
    %cst_95 = arith.constant -1.000000e+30 : f32
    %225 = vector.shape_cast %224 : vector<1x16x16xi1> to vector<1x16x16xi1>
    %226 = vector.broadcast %225 : vector<1x16x16xi1> to vector<2x16x16xi1>
    %227 = vector.broadcast %cst_95 : f32 to vector<2x16x16xf32>
    %228 = arith.select %226, %223, %227 : vector<2x16x16xi1>, vector<2x16x16xf32>
    %cst_96 = arith.constant dense<0xFF800000> : vector<2x16xf32>
    %229 = vector.multi_reduction <maximumf>, %228, %cst_96 [2] : vector<2x16x16xf32> to vector<2x16xf32>
    %230 = vector.shape_cast %229 : vector<2x16xf32> to vector<2x16x1xf32>
    %231 = vector.broadcast %230 : vector<2x16x1xf32> to vector<2x16x16xf32>
    %232 = arith.subf %228, %231 : vector<2x16x16xf32>
    %233 = math.exp %232 : vector<2x16x16xf32>
    %cst_97 = arith.constant dense<0.000000e+00> : vector<2x16xf32>
    %234 = vector.multi_reduction <add>, %233, %cst_97 [2] : vector<2x16x16xf32> to vector<2x16xf32>
    %235 = vector.shape_cast %234 : vector<2x16xf32> to vector<2x16x1xf32>
    %236 = tpu.reciprocal %235 {approx = true} : vector<2x16x1xf32> -> vector<2x16x1xf32>
    %237 = vector.broadcast %236 : vector<2x16x1xf32> to vector<2x16x16xf32>
    %238 = arith.mulf %233, %237 : vector<2x16x16xf32>
    %239 = vector.shape_cast %207 : vector<16x128xbf16> to vector<1x16x128xbf16>
    %240 = vector.shape_cast %239 : vector<1x16x128xbf16> to vector<1x16x128xbf16>
    %241 = vector.broadcast %240 : vector<1x16x128xbf16> to vector<2x16x128xbf16>
    %242 = arith.truncf %238 : vector<2x16x16xf32> to vector<2x16x16xbf16>
    "tpu.trace_start"() <{level = 10 : i32, message = "hij,hjk->hik"}> : () -> ()
    %cst_98 = arith.constant dense<0.000000e+00> : vector<2x16x128xf32>
    %243 = tpu.matmul %242, %241, %cst_98 {dimension_numbers = #tpu.dot_dimension_numbers<[2], [1], [1], [2], [0, 0, 0, 1, 1, 2], [0], [0]>} : vector<2x16x16xbf16>, vector<2x16x128xbf16>, vector<2x16x128xf32> -> vector<2x16x128xf32>
    "tpu.trace_stop"() : () -> ()
    %c3_99 = arith.constant 3 : index
    %c0_100 = arith.constant 0 : index
    %c0_101 = arith.constant 0 : index
    %244 = vector.load %arg6[%c3_99, %c0_100, %c0_101] : memref<4x2x128xf32, #tpu.memory_space<vmem>>, vector<1x2x128xf32>
    %245 = vector.shape_cast %244 : vector<1x2x128xf32> to vector<2x128xf32>
    %246 = vector.extract_strided_slice %243 {offsets = [0, 0, 0], sizes = [1, 16, 128], strides = [1, 1, 1]} : vector<2x16x128xf32> to vector<1x16x128xf32>
    %247 = vector.shape_cast %246 : vector<1x16x128xf32> to vector<16x128xf32>
    %248 = vector.extract_strided_slice %245 {offsets = [0, 0], sizes = [1, 128], strides = [1, 1]} : vector<2x128xf32> to vector<1x128xf32>
    %249 = vector.broadcast %248 : vector<1x128xf32> to vector<16x128xf32>
    %250 = arith.mulf %247, %249 : vector<16x128xf32>
    %251 = vector.extract_strided_slice %243 {offsets = [1, 0, 0], sizes = [1, 16, 128], strides = [1, 1, 1]} : vector<2x16x128xf32> to vector<1x16x128xf32>
    %252 = vector.shape_cast %251 : vector<1x16x128xf32> to vector<16x128xf32>
    %253 = vector.extract_strided_slice %245 {offsets = [1, 0], sizes = [1, 128], strides = [1, 1]} : vector<2x128xf32> to vector<1x128xf32>
    %254 = vector.broadcast %253 : vector<1x128xf32> to vector<16x128xf32>
    %255 = arith.mulf %252, %254 : vector<16x128xf32>
    %256 = arith.addf %250, %255 : vector<16x128xf32>
    %c3_102 = arith.constant 3 : index
    %c0_103 = arith.constant 0 : index
    %c0_104 = arith.constant 0 : index
    %257 = vector.load %arg5[%c3_102, %c0_103, %c0_104] : memref<4x1x128xf32, #tpu.memory_space<vmem>>, vector<1x1x128xf32>
    %258 = vector.shape_cast %257 : vector<1x1x128xf32> to vector<1x128xf32>
    %259 = vector.broadcast %258 : vector<1x128xf32> to vector<16x128xf32>
    %260 = arith.addf %256, %259 : vector<16x128xf32>
    %cst_105 = arith.constant 0.000000e+00 : f32
    %261 = vector.broadcast %cst_105 : f32 to vector<16x128xf32>
    %262 = arith.cmpf ogt, %260, %261 : vector<16x128xf32>
    %cst_106 = arith.constant 0.000000e+00 : f32
    %263 = vector.broadcast %cst_106 : f32 to vector<16x128xf32>
    %264 = arith.minimumf %260, %263 : vector<16x128xf32>
    %265 = math.exp %264 : vector<16x128xf32>
    %cst_107 = arith.constant 1.000000e+00 : f32
    %266 = vector.broadcast %cst_107 : f32 to vector<16x128xf32>
    %267 = arith.subf %265, %266 : vector<16x128xf32>
    %268 = arith.select %262, %260, %267 : vector<16x128xi1>, vector<16x128xf32>
    %269 = arith.truncf %268 : vector<16x128xf32> to vector<16x128xbf16>
    %c0_108 = arith.constant 0 : index
    %c0_109 = arith.constant 0 : index
    %c0_110 = arith.constant 0 : index
    %270 = vector.load %arg7[%c0_108, %c0_109, %c0_110] : memref<3x128x128xbf16, #tpu.memory_space<vmem>>, vector<1x128x128xbf16>
    %271 = vector.shape_cast %270 : vector<1x128x128xbf16> to vector<128x128xbf16>
    %cst_111 = arith.constant dense<0.000000e+00> : vector<16x128xf32>
    %272 = tpu.matmul %269, %271, %cst_111 {dimension_numbers = #tpu.dot_dimension_numbers<[1], [0], [0], [1], [0, 0, 1, 1], [], []>} : vector<16x128xbf16>, vector<128x128xbf16>, vector<16x128xf32> -> vector<16x128xf32>
    %c0_112 = arith.constant 0 : index
    %c0_113 = arith.constant 0 : index
    %c0_114 = arith.constant 0 : index
    %273 = vector.load %arg8[%c0_112, %c0_113, %c0_114] : memref<3x1x128xf32, #tpu.memory_space<vmem>>, vector<1x1x128xf32>
    %274 = vector.shape_cast %273 : vector<1x1x128xf32> to vector<1x128xf32>
    %275 = vector.broadcast %274 : vector<1x128xf32> to vector<16x128xf32>
    %276 = arith.addf %272, %275 : vector<16x128xf32>
    %cst_115 = arith.constant 0.000000e+00 : f32
    %277 = vector.broadcast %cst_115 : f32 to vector<16x128xf32>
    %278 = arith.maximumf %276, %277 : vector<16x128xf32>
    %279 = arith.truncf %278 : vector<16x128xf32> to vector<16x128xbf16>
    %c1_116 = arith.constant 1 : index
    %c0_117 = arith.constant 0 : index
    %c0_118 = arith.constant 0 : index
    %280 = vector.load %arg7[%c1_116, %c0_117, %c0_118] : memref<3x128x128xbf16, #tpu.memory_space<vmem>>, vector<1x128x128xbf16>
    %281 = vector.shape_cast %280 : vector<1x128x128xbf16> to vector<128x128xbf16>
    %cst_119 = arith.constant dense<0.000000e+00> : vector<16x128xf32>
    %282 = tpu.matmul %279, %281, %cst_119 {dimension_numbers = #tpu.dot_dimension_numbers<[1], [0], [0], [1], [0, 0, 1, 1], [], []>} : vector<16x128xbf16>, vector<128x128xbf16>, vector<16x128xf32> -> vector<16x128xf32>
    %c1_120 = arith.constant 1 : index
    %c0_121 = arith.constant 0 : index
    %c0_122 = arith.constant 0 : index
    %283 = vector.load %arg8[%c1_120, %c0_121, %c0_122] : memref<3x1x128xf32, #tpu.memory_space<vmem>>, vector<1x1x128xf32>
    %284 = vector.shape_cast %283 : vector<1x1x128xf32> to vector<1x128xf32>
    %285 = vector.broadcast %284 : vector<1x128xf32> to vector<16x128xf32>
    %286 = arith.addf %282, %285 : vector<16x128xf32>
    %cst_123 = arith.constant 0.000000e+00 : f32
    %287 = vector.broadcast %cst_123 : f32 to vector<16x128xf32>
    %288 = arith.maximumf %286, %287 : vector<16x128xf32>
    %289 = arith.truncf %288 : vector<16x128xf32> to vector<16x128xbf16>
    %c2_124 = arith.constant 2 : index
    %c0_125 = arith.constant 0 : index
    %c0_126 = arith.constant 0 : index
    %290 = vector.load %arg7[%c2_124, %c0_125, %c0_126] : memref<3x128x128xbf16, #tpu.memory_space<vmem>>, vector<1x128x128xbf16>
    %291 = vector.shape_cast %290 : vector<1x128x128xbf16> to vector<128x128xbf16>
    %cst_127 = arith.constant dense<0.000000e+00> : vector<16x128xf32>
    %292 = tpu.matmul %289, %291, %cst_127 {dimension_numbers = #tpu.dot_dimension_numbers<[1], [0], [0], [1], [0, 0, 1, 1], [], []>} : vector<16x128xbf16>, vector<128x128xbf16>, vector<16x128xf32> -> vector<16x128xf32>
    %c2_128 = arith.constant 2 : index
    %c0_129 = arith.constant 0 : index
    %c0_130 = arith.constant 0 : index
    %293 = vector.load %arg8[%c2_128, %c0_129, %c0_130] : memref<3x1x128xf32, #tpu.memory_space<vmem>>, vector<1x1x128xf32>
    %294 = vector.shape_cast %293 : vector<1x1x128xf32> to vector<1x128xf32>
    %295 = vector.broadcast %294 : vector<1x128xf32> to vector<16x128xf32>
    %296 = arith.addf %292, %295 : vector<16x128xf32>
    %cst_131 = arith.constant 0.000000e+00 : f32
    %297 = vector.broadcast %cst_131 : f32 to vector<16x128xf32>
    %298 = arith.subf %297, %296 : vector<16x128xf32>
    %299 = math.exp %298 : vector<16x128xf32>
    %cst_132 = arith.constant 1.000000e+00 : f32
    %300 = vector.broadcast %cst_132 : f32 to vector<16x128xf32>
    %301 = arith.addf %300, %299 : vector<16x128xf32>
    %302 = tpu.reciprocal %301 : vector<16x128xf32> -> vector<16x128xf32>
    %c0_133 = arith.constant 0 : index
    %c0_134 = arith.constant 0 : index
    %303 = vector.load %arg9[%c0_133, %c0_134] : memref<16x128xf32, #tpu.memory_space<vmem>>, vector<16x128xf32>
    tpu.vector_store %arg9[%c0_133, %c0_134], %302 {strides = array<i32>} : memref<16x128xf32, #tpu.memory_space<vmem>>, vector<16x128xf32>,
    return
  }
}

</mosaic_0001>

<llo_original>
// kernel: tpu_custom_call.1
$region0: #{tpu_custom_call.1}
  #allocation0 [shape = 'u32[]', space=smem, size = 0x4, offset = 0x4, fixed_abs, tag = 'smem constant byte address 0x4 - core index']
  #allocation1 [shape = 'u32[144,128]{1,0:T(1,128)}', space=vmem, size = 0x12000, scoped, tag = 'internal scratch']
  %s0 = inlined_call_operand.hbm [shape: f32[16,128], index: 0, kind: input, shape index: {}]
  %s1 = inlined_call_operand.hbm [shape: s8[16,16], index: 1, kind: input, shape index: {}]
  %s2 = inlined_call_operand.hbm [shape: bf16[4,128,128], index: 2, kind: input, shape index: {}]
  %s3 = inlined_call_operand.vmem [shape: bf16[4,2,128], index: 3, kind: input, shape index: {}]
  %s4 = inlined_call_operand.hbm [shape: bf16[4,2,128], index: 4, kind: input, shape index: {}]
  %s5 = inlined_call_operand.vmem [shape: f32[4,1,128], index: 5, kind: input, shape index: {}]
  %s6 = inlined_call_operand.vmem [shape: f32[4,2,128], index: 6, kind: input, shape index: {}]
  %s7 = inlined_call_operand.hbm [shape: bf16[3,128,128], index: 7, kind: input, shape index: {}]
  %s8 = inlined_call_operand.vmem [shape: f32[3,1,128], index: 8, kind: input, shape index: {}]
  %s9 = inlined_call_operand.hbm [shape: f32[16,128], index: 9, kind: output, shape index: {}]
  %s10 = sld [smem:[#allocation0]]
  $region66: #{tpu_custom_call.1} parent=0
    _
  %s12 = ssub.s32 1, %s10
  %s13 = scalar_select 0, %s12, %s10
  $region1: #{tpu_custom_call.1} parent=0
    #allocation2 [shape = 'u8[8192]{0}', space=vmem, size = 0x2000, scoped, tag = 'input window, operand 0, single buffered']
    #allocation3 [shape = 's32[1]{0}', space=sflag, size = 0x4, scoped, tag = 'scoped memory for tpu_custom_call.1']
    #allocation4 [shape = 's32[1]{0}', space=sflag, size = 0x4, scoped, tag = 'scoped memory for tpu_custom_call.1']
    #allocation5 [shape = 'u8[2048]{0}', space=vmem, size = 0x800, scoped, tag = 'input window, operand 1, single buffered']
    #allocation6 [shape = 's32[1]{0}', space=sflag, size = 0x4, scoped, tag = 'scoped memory for tpu_custom_call.1']
    #allocation7 [shape = 'u8[131072]{0}', space=vmem, size = 0x20000, scoped, tag = 'input window, operand 2, single buffered']
    #allocation8 [shape = 'u8[2048]{0}', space=vmem, size = 0x800, scoped, tag = 'input window, operand 4, single buffered']
    #allocation9 [shape = 's32[1]{0}', space=sflag, size = 0x4, scoped, tag = 'scoped memory for tpu_custom_call.1']
    #allocation10 [shape = 'u8[98304]{0}', space=vmem, size = 0x18000, scoped, tag = 'input window, operand 7, single buffered']
    #allocation11 [shape = 'u8[8192]{0}', space=vmem, size = 0x2000, scoped, tag = 'output window, operand 0, single buffered']
    %14 = vsyncpa [#allocation3], 0
    %15 = vsyncpa [#allocation6], 0
    %16 = vsyncpa [#allocation9], 0
    %17 = vsyncpa [#allocation4], 0
    // Predicated region
    $region2: #{tpu_custom_call.1} parent=1 // pred_check
      _
    $region3: #{tpu_custom_call.1} parent=1 // pred_check_branch
      %19 = sbr.rel (0) target = $region5
    $region4: #{tpu_custom_call.1} parent=1 // pred_region
      %s21 = ssub.s32 256, 256
      %22 = vsyncadd [#allocation3], %s21
      %s23 = sshll.u32 [#allocation2], 4
      %s24 = int_to_ptr.vmem [resolvable:$true] %s23
      %29 = dma.hbm_to_vmem [thread:$0]  %s0, 256, %s24, [#allocation3], 128, 128, 8
    $region5: #{tpu_custom_call.1} parent=1 // pred_fallthru
      _
    // Predicated region
    $region6: #{tpu_custom_call.1} parent=1 // pred_check
      _
    $region7: #{tpu_custom_call.1} parent=1 // pred_check_branch
      %31 = sbr.rel (0) target = $region9
    $region8: #{tpu_custom_call.1} parent=1 // pred_region
      %s33 = ssub.s32 64, 64
      %34 = vsyncadd [#allocation6], %s33
      %s35 = sshll.u32 [#allocation5], 4
      %s36 = int_to_ptr.vmem [resolvable:$true] %s35
      %41 = dma.hbm_to_vmem [thread:$0]  %s1, 64, %s36, [#allocation6], 32, 32, 2
    $region9: #{tpu_custom_call.1} parent=1 // pred_fallthru
      _
    // Predicated region
    $region10: #{tpu_custom_call.1} parent=1 // pred_check
      _
    $region11: #{tpu_custom_call.1} parent=1 // pred_check_branch
      %43 = sbr.rel (0) target = $region13
    $region12: #{tpu_custom_call.1} parent=1 // pred_region
      %s45 = ssub.s32 4096, 4096
      %46 = vsyncadd [#allocation6], %s45
      %s47 = sshll.u32 [#allocation7], 4
      %s48 = int_to_ptr.vmem [resolvable:$true] %s47
      %53 = dma.hbm_to_vmem [thread:$0]  %s2, 4096, %s48, [#allocation6], 64, 64, 4
    $region13: #{tpu_custom_call.1} parent=1 // pred_fallthru
      _
    // Predicated region
    $region14: #{tpu_custom_call.1} parent=1 // pred_check
      _
    $region15: #{tpu_custom_call.1} parent=1 // pred_check_branch
      %55 = sbr.rel (0) target = $region17
    $region16: #{tpu_custom_call.1} parent=1 // pred_region
      _
    $region17: #{tpu_custom_call.1} parent=1 // pred_fallthru
      _
    // Predicated region
    $region18: #{tpu_custom_call.1} parent=1 // pred_check
      _
    $region19: #{tpu_custom_call.1} parent=1 // pred_check_branch
      %57 = sbr.rel (0) target = $region21
    $region20: #{tpu_custom_call.1} parent=1 // pred_region
      %s59 = ssub.s32 64, 64
      %60 = vsyncadd [#allocation9], %s59
      %s61 = sshll.u32 [#allocation8], 4
      %s62 = int_to_ptr.vmem [resolvable:$true] %s61
      %67 = dma.hbm_to_vmem [thread:$0]  %s4, 64, %s62, [#allocation9], 16, 16, 1
    $region21: #{tpu_custom_call.1} parent=1 // pred_fallthru
      _
    // Predicated region
    $region22: #{tpu_custom_call.1} parent=1 // pred_check
      _
    $region23: #{tpu_custom_call.1} parent=1 // pred_check_branch
      %69 = sbr.rel (0) target = $region25
    $region24: #{tpu_custom_call.1} parent=1 // pred_region
      _
    $region25: #{tpu_custom_call.1} parent=1 // pred_fallthru
      _
    // Predicated region
    $region26: #{tpu_custom_call.1} parent=1 // pred_check
      _
    $region27: #{tpu_custom_call.1} parent=1 // pred_check_branch
      %71 = sbr.rel (0) target = $region29
    $region28: #{tpu_custom_call.1} parent=1 // pred_region
      _
    $region29: #{tpu_custom_call.1} parent=1 // pred_fallthru
      _
    // Predicated region
    $region30: #{tpu_custom_call.1} parent=1 // pred_check
      _
    $region31: #{tpu_custom_call.1} parent=1 // pred_check_branch
      %73 = sbr.rel (0) target = $region33
    $region32: #{tpu_custom_call.1} parent=1 // pred_region
      %s75 = ssub.s32 3072, 3072
      %76 = vsyncadd [#allocation9], %s75
      %s77 = sshll.u32 [#allocation10], 4
      %s78 = int_to_ptr.vmem [resolvable:$true] %s77
      %83 = dma.hbm_to_vmem [thread:$0]  %s7, 3072, %s78, [#allocation9], 64, 64, 4
    $region33: #{tpu_custom_call.1} parent=1 // pred_fallthru
      _
    // Predicated region
    $region34: #{tpu_custom_call.1} parent=1 // pred_check
      _
    $region35: #{tpu_custom_call.1} parent=1 // pred_check_branch
      %85 = sbr.rel (0) target = $region37
    $region36: #{tpu_custom_call.1} parent=1 // pred_region
      _
    $region37: #{tpu_custom_call.1} parent=1 // pred_fallthru
      _
    // Predicated region
    $region38: #{tpu_custom_call.1} parent=1 // pred_check
      _
    $region39: #{tpu_custom_call.1} parent=1 // pred_check_branch
      %87 = sbr.rel (0) target = $region41
    $region40: #{tpu_custom_call.1} parent=1 // pred_region
      %88 = dma.done [#allocation3], 256
    $region41: #{tpu_custom_call.1} parent=1 // pred_fallthru
      _
    // Predicated region
    $region42: #{tpu_custom_call.1} parent=1 // pred_check
      _
    $region43: #{tpu_custom_call.1} parent=1 // pred_check_branch
      %90 = sbr.rel (0) target = $region45
    $region44: #{tpu_custom_call.1} parent=1 // pred_region
      %91 = dma.done [#allocation6], 64
    $region45: #{tpu_custom_call.1} parent=1 // pred_fallthru
      _
    // Predicated region
    $region46: #{tpu_custom_call.1} parent=1 // pred_check
      _
    $region47: #{tpu_custom_call.1} parent=1 // pred_check_branch
      %93 = sbr.rel (0) target = $region49
    $region48: #{tpu_custom_call.1} parent=1 // pred_region
      %94 = dma.done [#allocation6], 4096
    $region49: #{tpu_custom_call.1} parent=1 // pred_fallthru
      _
    // Predicated region
    $region50: #{tpu_custom_call.1} parent=1 // pred_check
      _
    $region51: #{tpu_custom_call.1} parent=1 // pred_check_branch
      %96 = sbr.rel (0) target = $region53
    $region52: #{tpu_custom_call.1} parent=1 // pred_region
      %97 = dma.done [#allocation9], 64
    $region53: #{tpu_custom_call.1} parent=1 // pred_fallthru
      _
    // Predicated region
    $region54: #{tpu_custom_call.1} parent=1 // pred_check
      _
    $region55: #{tpu_custom_call.1} parent=1 // pred_check_branch
      %99 = sbr.rel (0) target = $region57
    $region56: #{tpu_custom_call.1} parent=1 // pred_region
      %100 = dma.done [#allocation9], 3072
    $region57: #{tpu_custom_call.1} parent=1 // pred_fallthru
      _
    %v102 = vld [vmem:[#allocation5] sm:$0x3]
    %v103 = vld [vmem:[#allocation5 + $0x2] sm:$0x3]
    %v104 = vunpack.c.0.s8 %v102
    %v105 = vunpack.c.0.s8 %v103
    %v106 = vcvt.s32.f32 %v104
    %v107 = vcvt.s32.f32 %v105
    %vm108 = vcmp.gt.f32.partialorder %v106, 0.0
    %vm109 = vcmp.gt.f32.partialorder %v107, 0.0
    %v110 = vld [vmem:[#allocation2] sm:$0xff]
    %v111 = vld [vmem:[#allocation2 + $0x8] sm:$0xff]
    %v112 = vpack.c.bf16 %v111, %v110
    %v113 = vld [vmem:[#allocation7] sm:$0xf]
    %v114 = vld [vmem:[#allocation7 + $0x4] sm:$0xf]
    %v115 = vld [vmem:[#allocation7 + $0x8] sm:$0xf]
    %v116 = vld [vmem:[#allocation7 + $0xc] sm:$0xf]
    %v117 = vld [vmem:[#allocation7 + $0x10] sm:$0xf]
    %v118 = vld [vmem:[#allocation7 + $0x14] sm:$0xf]
    %v119 = vld [vmem:[#allocation7 + $0x18] sm:$0xf]
    %v120 = vld [vmem:[#allocation7 + $0x1c] sm:$0xf]
    %v121 = vld [vmem:[#allocation7 + $0x20] sm:$0xf]
    %v122 = vld [vmem:[#allocation7 + $0x24] sm:$0xf]
    %v123 = vld [vmem:[#allocation7 + $0x28] sm:$0xf]
    %v124 = vld [vmem:[#allocation7 + $0x2c] sm:$0xf]
    %v125 = vld [vmem:[#allocation7 + $0x30] sm:$0xf]
    %v126 = vld [vmem:[#allocation7 + $0x34] sm:$0xf]
    %v127 = vld [vmem:[#allocation7 + $0x38] sm:$0xf]
    %v128 = vld [vmem:[#allocation7 + $0x3c] sm:$0xf]
    %v145 = vunpack.c.l.b16 %v113
    %v146 = vunpack.c.l.b16 %v114
    %v147 = vunpack.c.l.b16 %v115
    %v148 = vunpack.c.l.b16 %v116
    %v149 = vunpack.c.l.b16 %v117
    %v150 = vunpack.c.l.b16 %v118
    %v151 = vunpack.c.l.b16 %v119
    %v152 = vunpack.c.l.b16 %v120
    %v153 = vunpack.c.l.b16 %v121
    %v154 = vunpack.c.l.b16 %v122
    %v155 = vunpack.c.l.b16 %v123
    %v156 = vunpack.c.l.b16 %v124
    %v157 = vunpack.c.l.b16 %v125
    %v158 = vunpack.c.l.b16 %v126
    %v159 = vunpack.c.l.b16 %v127
    %v160 = vunpack.c.l.b16 %v128
    %v161 = vpack.c.b16 %v146, %v145
    %v162 = vpack.c.b16 %v148, %v147
    %v163 = vpack.c.b16 %v150, %v149
    %v164 = vpack.c.b16 %v152, %v151
    %v165 = vpack.c.b16 %v154, %v153
    %v166 = vpack.c.b16 %v156, %v155
    %v167 = vpack.c.b16 %v158, %v157
    %v168 = vpack.c.b16 %v160, %v159
    %177 = vmatprep.subr.bf16.mxu0 0
    %178 = vmatpush1.bf16.msra.mxu0 %v161
    %179 = vmatprep.subr.bf16.mxu0 0
    %180 = vmatpush1.bf16.msra.mxu0 %v162
    %181 = vmatprep.subr.bf16.mxu0 0
    %182 = vmatpush1.bf16.msra.mxu0 %v163
    %183 = vmatprep.subr.bf16.mxu0 0
    %184 = vmatpush1.bf16.msra.mxu0 %v164
    %185 = vmatprep.subr.bf16.mxu0 0
    %186 = vmatpush1.bf16.msra.mxu0 %v165
    %187 = vmatprep.subr.bf16.mxu0 0
    %188 = vmatpush1.bf16.msra.mxu0 %v166
    %189 = vmatprep.subr.bf16.mxu0 0
    %190 = vmatpush1.bf16.msra.mxu0 %v167
    %191 = vmatprep.subr.bf16.mxu0 0
    %192 = vmatpush1.bf16.msra.mxu0 %v168
    %193 = vmatprep.subr.bf16.mxu0 0
    %194 = vmatpush1.bf16.msra.mxu0 0
    %195 = vmatprep.subr.bf16.mxu0 0
    %196 = vmatpush1.bf16.msra.mxu0 0
    %197 = vmatprep.subr.bf16.mxu0 0
    %198 = vmatpush1.bf16.msra.mxu0 0
    %199 = vmatprep.subr.bf16.mxu0 0
    %200 = vmatpush1.bf16.msra.mxu0 0
    %201 = vmatprep.subr.bf16.mxu0 0
    %202 = vmatpush1.bf16.msra.mxu0 0
    %203 = vmatprep.subr.bf16.mxu0 0
    %204 = vmatpush1.bf16.msra.mxu0 0
    %205 = vmatprep.subr.bf16.mxu0 0
    %206 = vmatpush1.bf16.msra.mxu0 0
    %207 = vmatprep.subr.bf16.mxu0 0
    %208 = vmatpush1.bf16.msra.mxu0 0
    %209 = vmatprep.mubr.bf16.mxu0 0
    %210 = vmatmul.mubr.bf16.gmra.mrb[0].mxu0 %v112
    %v211 = vpop.f32.mrb[0].mxu0
    %v212 = vadd.f32 0.0, %v211
    %v213 = vpop.f32.mrb[0].mxu0
    %v214 = vpop.f32.mrb[0].mxu0
    %v215 = vadd.f32 0.0, %v214
    %v216 = vpop.f32.mrb[0].mxu0
    %217 = vdwg.mxu0
    %v218 = vpack.c.bf16 %v215, %v212
    %v219 = vld [vmem:[%s3] sm:$0x1]
    %220 = vmatprep.subr.bf16.mxu0 0
    %221 = vmatpush1.bf16.xpose.msra.mxu0 %v218
    %222 = vmatprep.subr.bf16.mxu0 0
    %223 = vmatpush1.bf16.xpose.msra.mxu0 0
    %224 = vmatprep.subr.bf16.mxu0 0
    %225 = vmatpush1.bf16.xpose.msra.mxu0 0
    %226 = vmatprep.subr.bf16.mxu0 0
    %227 = vmatpush1.bf16.xpose.msra.mxu0 0
    %228 = vmatprep.subr.bf16.mxu0 0
    %229 = vmatpush1.bf16.xpose.msra.mxu0 0
    %230 = vmatprep.subr.bf16.mxu0 0
    %231 = vmatpush1.bf16.xpose.msra.mxu0 0
    %232 = vmatprep.subr.bf16.mxu0 0
    %233 = vmatpush1.bf16.xpose.msra.mxu0 0
    %234 = vmatprep.subr.bf16.mxu0 0
    %235 = vmatpush1.bf16.xpose.msra.mxu0 0
    %236 = vmatprep.subr.bf16.mxu0 0
    %237 = vmatpush1.bf16.xpose.msra.mxu0 0
    %238 = vmatprep.subr.bf16.mxu0 0
    %239 = vmatpush1.bf16.xpose.msra.mxu0 0
    %240 = vmatprep.subr.bf16.mxu0 0
    %241 = vmatpush1.bf16.xpose.msra.mxu0 0
    %242 = vmatprep.subr.bf16.mxu0 0
    %243 = vmatpush1.bf16.xpose.msra.mxu0 0
    %244 = vmatprep.subr.bf16.mxu0 0
    %245 = vmatpush1.bf16.xpose.msra.mxu0 0
    %246 = vmatprep.subr.bf16.mxu0 0
    %247 = vmatpush1.bf16.xpose.msra.mxu0 0
    %248 = vmatprep.subr.bf16.mxu0 0
    %249 = vmatpush1.bf16.xpose.msra.mxu0 0
    %250 = vmatprep.subr.bf16.mxu0 0
    %251 = vmatpush1.bf16.xpose.msra.mxu0 0
    %252 = vmatprep.mubr.bf16.mxu0 0
    %253 = vmatmul.mubr.bf16.gmra.mrb[0].mxu0 %v219
    %v254 = vpop.f32.mrb[0].mxu0
    %v255 = vadd.f32 0.0, %v254
    %v256 = vpop.f32.mrb[0].mxu0
    %v257 = vpop.f32.mrb[0].mxu0
    %v258 = vpop.f32.mrb[0].mxu0
    %259 = vdwg.mxu0
    %v260 = vld [vmem:[#allocation8] sm:$0x1]
    %261 = vmatprep.subr.bf16.mxu0 0
    %262 = vmatpush1.bf16.xpose.msra.mxu0 %v218
    %263 = vmatprep.subr.bf16.mxu0 0
    %264 = vmatpush1.bf16.xpose.msra.mxu0 0
    %265 = vmatprep.subr.bf16.mxu0 0
    %266 = vmatpush1.bf16.xpose.msra.mxu0 0
    %267 = vmatprep.subr.bf16.mxu0 0
    %268 = vmatpush1.bf16.xpose.msra.mxu0 0
    %269 = vmatprep.subr.bf16.mxu0 0
    %270 = vmatpush1.bf16.xpose.msra.mxu0 0
    %271 = vmatprep.subr.bf16.mxu0 0
    %272 = vmatpush1.bf16.xpose.msra.mxu0 0
    %273 = vmatprep.subr.bf16.mxu0 0
    %274 = vmatpush1.bf16.xpose.msra.mxu0 0
    %275 = vmatprep.subr.bf16.mxu0 0
    %276 = vmatpush1.bf16.xpose.msra.mxu0 0
    %277 = vmatprep.subr.bf16.mxu0 0
    %278 = vmatpush1.bf16.xpose.msra.mxu0 0
    %279 = vmatprep.subr.bf16.mxu0 0
    %280 = vmatpush1.bf16.xpose.msra.mxu0 0
    %281 = vmatprep.subr.bf16.mxu0 0
    %282 = vmatpush1.bf16.xpose.msra.mxu0 0
    %283 = vmatprep.subr.bf16.mxu0 0
    %284 = vmatpush1.bf16.xpose.msra.mxu0 0
    %285 = vmatprep.subr.bf16.mxu0 0
    %286 = vmatpush1.bf16.xpose.msra.mxu0 0
    %287 = vmatprep.subr.bf16.mxu0 0
    %288 = vmatpush1.bf16.xpose.msra.mxu0 0
    %289 = vmatprep.subr.bf16.mxu0 0
    %290 = vmatpush1.bf16.xpose.msra.mxu0 0
    %291 = vmatprep.subr.bf16.mxu0 0
    %292 = vmatpush1.bf16.xpose.msra.mxu0 0
    %293 = vmatprep.mubr.bf16.mxu0 0
    %294 = vmatmul.mubr.bf16.gmra.mrb[0].mxu0 %v260
    %v295 = vpop.f32.mrb[0].mxu0
    %v296 = vadd.f32 0.0, %v295
    %v297 = vpop.f32.mrb[0].mxu0
    %v298 = vpop.f32.mrb[0].mxu0
    %v299 = vpop.f32.mrb[0].mxu0
    %300 = vdwg.mxu0
    %v301 = vlaneseq
    %v302 = vshrl.u32 %v301, 7
    %v303 = vsub.s32 0, %v302
    %v304 = vrot.slane %v296, %v303
    %306 = vbcast.lane.b32.xlu0 %v304, 256
    %v307 = vpop.permute.xlu0 %306
    %s309 = sor.u32 256, 8
    %310 = vbcast.lane.b32.xlu0 %v304, %s309
    %v311 = vpop.permute.xlu0 %310
    %v312 = vlaneseq
    %v313 = vshrl.u32 %v312, 7
    %v314 = vsub.s32 1, %v313
    %v315 = vrot.slane %v296, %v314
    %317 = vbcast.lane.b32.xlu0 %v315, 256
    %v318 = vpop.permute.xlu0 %317
    %s320 = sor.u32 256, 8
    %321 = vbcast.lane.b32.xlu0 %v315, %s320
    %v322 = vpop.permute.xlu0 %321
    %v325 = vunpack.c.l.s4 1966171168
    %v326 = vunpack.c.0.s8 %v325
    %v327 = vlaneseq
    %v328 = vshrl.u32 %v327, 7
    %v329 = vsub.s32 %v326, %v328
    %v330 = vrot.slane %v255, %v329
    %v331 = vcombine.high %v330, %v330
    %v333 = vunpack.c.l.s4 1966171168
    %v334 = vunpack.c.0.s8 %v333
    %v335 = vlaneseq
    %v336 = vshrl.u32 %v335, 7
    %v337 = vsub.s32 %v334, %v336
    %v338 = vrot.slane %v330, %v337
    %v340 = vunpack.c.l.s4 1966171168
    %v341 = vunpack.c.0.s8 %v340
    %v342 = vlaneseq
    %v343 = vshrl.u32 %v342, 7
    %v344 = vsub.s32 %v341, %v343
    %v345 = vrot.slane %v331, %v344
    %v346 = vlaneseq
    %v347 = vshrl.u32 %v346, 7
    %v348 = vsub.s32 0, %v347
    %v349 = vrot.slane %v338, %v348
    %v350 = vlaneseq
    %v351 = vshrl.u32 %v350, 7
    %v352 = vsub.s32 0, %v351
    %v353 = vrot.slane %v345, %v352
    %v356 = vadd.f32 %v307, %v349
    %v357 = vadd.f32 %v311, %v349
    %v358 = vadd.f32 %v318, %v353
    %v359 = vadd.f32 %v322, %v353
    %vm360 = vcmp.gt.f32.partialorder %v356, 0.0
    %vm361 = vcmp.gt.f32.partialorder %v357, 0.0
    %vm362 = vcmp.gt.f32.partialorder %v358, 0.0
    %vm363 = vcmp.gt.f32.partialorder %v359, 0.0
    %v364 = vmul.f32 %v356, 0.2
    %v365 = vmul.f32 %v357, 0.2
    %v366 = vmul.f32 %v358, 0.2
    %v367 = vmul.f32 %v359, 0.2
    %v368 = vsel %vm360, %v356, %v364
    %v369 = vsel %vm361, %v357, %v365
    %v370 = vsel %vm362, %v358, %v366
    %v371 = vsel %vm363, %v359, %v367
    %v372 = vsel %vm108, 1, 0
    %v373 = vsel %vm109, 1, 0
    %vm374 = vcmp.eq.s32.totalorder %v372, 1
    %vm375 = vcmp.eq.s32.totalorder %v373, 1
    %v376 = vsel %vm374, %v368, -1e+30
    %v377 = vsel %vm375, %v369, -1e+30
    %v378 = vsel %vm374, %v370, -1e+30
    %v379 = vsel %vm375, %v371, -1e+30
    %vm380 = vcmask 130048
    %v381 = vsel %vm380, %v376, -inf
    %382 = vmax.xlane.f32.xlu0 %v381
    %v383 = vpop.xlane.xlu0 %382
    %v384 = vsel %vm380, %v377, -inf
    %385 = vmax.xlane.f32.xlu0 %v384
    %v386 = vpop.xlane.xlu0 %385
    %v387 = vsel %vm380, %v378, -inf
    %388 = vmax.xlane.f32.xlu0 %v387
    %v389 = vpop.xlane.xlu0 %388
    %v390 = vsel %vm380, %v379, -inf
    %391 = vmax.xlane.f32.xlu0 %v390
    %v392 = vpop.xlane.xlu0 %391
    %v393 = vsub.f32 %v376, %v383
    %v394 = vsub.f32 %v377, %v386
    %v395 = vsub.f32 %v378, %v389
    %v396 = vsub.f32 %v379, %v392
    %v397 = vmul.f32 %v393, 1.442695
    %v398 = vpow.pop %v397
    %v399 = vmul.f32 %v394, 1.442695
    %v400 = vpow.pop %v399
    %v401 = vmul.f32 %v395, 1.442695
    %v402 = vpow.pop %v401
    %v403 = vmul.f32 %v396, 1.442695
    %v404 = vpow.pop %v403
    %v405 = vsel %vm380, %v398, 0.0
    %406 = vadd.xlane.f32.xlu0 %v405
    %v407 = vpop.xlane.xlu0 %406
    %v408 = vsel %vm380, %v400, 0.0
    %409 = vadd.xlane.f32.xlu0 %v408
    %v410 = vpop.xlane.xlu0 %409
    %v411 = vsel %vm380, %v402, 0.0
    %412 = vadd.xlane.f32.xlu0 %v411
    %v413 = vpop.xlane.xlu0 %412
    %v414 = vsel %vm380, %v404, 0.0
    %415 = vadd.xlane.f32.xlu0 %v414
    %v416 = vpop.xlane.xlu0 %415
    %v417 = vrcp.pop %v407
    %v418 = vrcp.pop %v410
    %v419 = vrcp.pop %v413
    %v420 = vrcp.pop %v416
    %v421 = vmul.f32 %v398, %v417
    %v422 = vmul.f32 %v400, %v418
    %v423 = vmul.f32 %v402, %v419
    %v424 = vmul.f32 %v404, %v420
    %v425 = vpack.c.bf16 %v422, %v421
    %v426 = vpack.c.bf16 %v424, %v423
    %v428 = vsel %vm380, %v425, 0
    %430 = vmatprep.subr.bf16.mxu0 0
    %431 = vmatpush1.bf16.msra.mxu0 %v218
    %432 = vmatprep.subr.bf16.mxu0 0
    %433 = vmatpush1.bf16.msra.mxu0 0
    %434 = vmatprep.subr.bf16.mxu0 0
    %435 = vmatpush1.bf16.msra.mxu0 0
    %436 = vmatprep.subr.bf16.mxu0 0
    %437 = vmatpush1.bf16.msra.mxu0 0
    %438 = vmatprep.subr.bf16.mxu0 0
    %439 = vmatpush1.bf16.msra.mxu0 0
    %440 = vmatprep.subr.bf16.mxu0 0
    %441 = vmatpush1.bf16.msra.mxu0 0
    %442 = vmatprep.subr.bf16.mxu0 0
    %443 = vmatpush1.bf16.msra.mxu0 0
    %444 = vmatprep.subr.bf16.mxu0 0
    %445 = vmatpush1.bf16.msra.mxu0 0
    %446 = vmatprep.subr.bf16.mxu0 0
    %447 = vmatpush1.bf16.msra.mxu0 0
    %448 = vmatprep.subr.bf16.mxu0 0
    %449 = vmatpush1.bf16.msra.mxu0 0
    %450 = vmatprep.subr.bf16.mxu0 0
    %451 = vmatpush1.bf16.msra.mxu0 0
    %452 = vmatprep.subr.bf16.mxu0 0
    %453 = vmatpush1.bf16.msra.mxu0 0
    %454 = vmatprep.subr.bf16.mxu0 0
    %455 = vmatpush1.bf16.msra.mxu0 0
    %456 = vmatprep.subr.bf16.mxu0 0
    %457 = vmatpush1.bf16.msra.mxu0 0
    %458 = vmatprep.subr.bf16.mxu0 0
    %459 = vmatpush1.bf16.msra.mxu0 0
    %460 = vmatprep.subr.bf16.mxu0 0
    %461 = vmatpush1.bf16.msra.mxu0 0
    %462 = vmatprep.mubr.bf16.mxu0 0
    %463 = vmatmul.mubr.bf16.gmra.mrb[0].mxu0 %v428
    %v464 = vpop.f32.mrb[0].mxu0
    %v465 = vadd.f32 0.0, %v464
    %v466 = vpop.f32.mrb[0].mxu0
    %v467 = vpop.f32.mrb[0].mxu0
    %v468 = vadd.f32 0.0, %v467
    %v469 = vpop.f32.mrb[0].mxu0
    %470 = vdwg.mxu0
    %v472 = vsel %vm380, %v426, 0
    %474 = vmatprep.subr.bf16.mxu0 0
    %475 = vmatpush1.bf16.msra.mxu0 %v218
    %476 = vmatprep.subr.bf16.mxu0 0
    %477 = vmatpush1.bf16.msra.mxu0 0
    %478 = vmatprep.subr.bf16.mxu0 0
    %479 = vmatpush1.bf16.msra.mxu0 0
    %480 = vmatprep.subr.bf16.mxu0 0
    %481 = vmatpush1.bf16.msra.mxu0 0
    %482 = vmatprep.subr.bf16.mxu0 0
    %483 = vmatpush1.bf16.msra.mxu0 0
    %484 = vmatprep.subr.bf16.mxu0 0
    %485 = vmatpush1.bf16.msra.mxu0 0
    %486 = vmatprep.subr.bf16.mxu0 0
    %487 = vmatpush1.bf16.msra.mxu0 0
    %488 = vmatprep.subr.bf16.mxu0 0
    %489 = vmatpush1.bf16.msra.mxu0 0
    %490 = vmatprep.subr.bf16.mxu0 0
    %491 = vmatpush1.bf16.msra.mxu0 0
    %492 = vmatprep.subr.bf16.mxu0 0
    %493 = vmatpush1.bf16.msra.mxu0 0
    %494 = vmatprep.subr.bf16.mxu0 0
    %495 = vmatpush1.bf16.msra.mxu0 0
    %496 = vmatprep.subr.bf16.mxu0 0
    %497 = vmatpush1.bf16.msra.mxu0 0
    %498 = vmatprep.subr.bf16.mxu0 0
    %499 = vmatpush1.bf16.msra.mxu0 0
    %500 = vmatprep.subr.bf16.mxu0 0
    %501 = vmatpush1.bf16.msra.mxu0 0
    %502 = vmatprep.subr.bf16.mxu0 0
    %503 = vmatpush1.bf16.msra.mxu0 0
    %504 = vmatprep.subr.bf16.mxu0 0
    %505 = vmatpush1.bf16.msra.mxu0 0
    %506 = vmatprep.mubr.bf16.mxu0 0
    %507 = vmatmul.mubr.bf16.gmra.mrb[0].mxu0 %v472
    %v508 = vpop.f32.mrb[0].mxu0
    %v509 = vadd.f32 0.0, %v508
    %v510 = vpop.f32.mrb[0].mxu0
    %v511 = vpop.f32.mrb[0].mxu0
    %v512 = vadd.f32 0.0, %v511
    %v513 = vpop.f32.mrb[0].mxu0
    %514 = vdwg.mxu0
    %v515 = vld [vmem:[%s6] sm:$0x3]
    %v516 = vlaneseq
    %v517 = vshrl.u32 %v516, 7
    %v518 = vsub.s32 0, %v517
    %v519 = vrot.slane %v515, %v518
    %v520 = vmul.f32 %v465, %v519
    %v521 = vmul.f32 %v468, %v519
    %v522 = vlaneseq
    %v523 = vshrl.u32 %v522, 7
    %v524 = vsub.s32 1, %v523
    %v525 = vrot.slane %v515, %v524
    %v526 = vmul.f32 %v509, %v525
    %v527 = vmul.f32 %v512, %v525
    %v528 = vadd.f32 %v520, %v526
    %v529 = vadd.f32 %v521, %v527
    %v530 = vld [vmem:[%s5] sm:$0x1]
    %v532 = vlaneseq
    %v533 = vshrl.u32 %v532, 7
    %v534 = vsub.s32 0, %v533
    %v535 = vrot.slane %v530, %v534
    %v537 = vadd.f32 %v528, %v535
    %v538 = vadd.f32 %v529, %v535
    %vm539 = vcmp.gt.f32.partialorder %v537, 0.0
    %vm540 = vcmp.gt.f32.partialorder %v538, 0.0
    %v541 = vmin.f32 %v537, 0.0
    %v542 = vmin.f32 %v538, 0.0
    %v543 = vmul.f32 %v541, 1.442695
    %v544 = vpow.pop %v543
    %v545 = vmul.f32 %v542, 1.442695
    %v546 = vpow.pop %v545
    %v547 = vsub.f32 %v544, 1.0
    %v548 = vsub.f32 %v546, 1.0
    %v549 = vsel %vm539, %v537, %v547
    %v550 = vsel %vm540, %v538, %v548
    %v551 = vpack.c.bf16 %v550, %v549
    %s552 = scalar_lea.vmem [#allocation7], 64
    %v553 = vld [vmem:[%s552] sm:$0xf]
    %v554 = vld [vmem:[%s552 + $0x4] sm:$0xf]
    %v555 = vld [vmem:[%s552 + $0x8] sm:$0xf]
    %v556 = vld [vmem:[%s552 + $0xc] sm:$0xf]
    %v557 = vld [vmem:[%s552 + $0x10] sm:$0xf]
    %v558 = vld [vmem:[%s552 + $0x14] sm:$0xf]
    %v559 = vld [vmem:[%s552 + $0x18] sm:$0xf]
    %v560 = vld [vmem:[%s552 + $0x1c] sm:$0xf]
    %v561 = vld [vmem:[%s552 + $0x20] sm:$0xf]
    %v562 = vld [vmem:[%s552 + $0x24] sm:$0xf]
    %v563 = vld [vmem:[%s552 + $0x28] sm:$0xf]
    %v564 = vld [vmem:[%s552 + $0x2c] sm:$0xf]
    %v565 = vld [vmem:[%s552 + $0x30] sm:$0xf]
    %v566 = vld [vmem:[%s552 + $0x34] sm:$0xf]
    %v567 = vld [vmem:[%s552 + $0x38] sm:$0xf]
    %v568 = vld [vmem:[%s552 + $0x3c] sm:$0xf]
    %v585 = vunpack.c.l.b16 %v553
    %v586 = vunpack.c.l.b16 %v554
    %v587 = vunpack.c.l.b16 %v555
    %v588 = vunpack.c.l.b16 %v556
    %v589 = vunpack.c.l.b16 %v557
    %v590 = vunpack.c.l.b16 %v558
    %v591 = vunpack.c.l.b16 %v559
    %v592 = vunpack.c.l.b16 %v560
    %v593 = vunpack.c.l.b16 %v561
    %v594 = vunpack.c.l.b16 %v562
    %v595 = vunpack.c.l.b16 %v563
    %v596 = vunpack.c.l.b16 %v564
    %v597 = vunpack.c.l.b16 %v565
    %v598 = vunpack.c.l.b16 %v566
    %v599 = vunpack.c.l.b16 %v567
    %v600 = vunpack.c.l.b16 %v568
    %v601 = vpack.c.b16 %v586, %v585
    %v602 = vpack.c.b16 %v588, %v587
    %v603 = vpack.c.b16 %v590, %v589
    %v604 = vpack.c.b16 %v592, %v591
    %v605 = vpack.c.b16 %v594, %v593
    %v606 = vpack.c.b16 %v596, %v595
    %v607 = vpack.c.b16 %v598, %v597
    %v608 = vpack.c.b16 %v600, %v599
    %617 = vmatprep.subr.bf16.mxu0 0
    %618 = vmatpush1.bf16.msra.mxu0 %v601
    %619 = vmatprep.subr.bf16.mxu0 0
    %620 = vmatpush1.bf16.msra.mxu0 %v602
    %621 = vmatprep.subr.bf16.mxu0 0
    %622 = vmatpush1.bf16.msra.mxu0 %v603
    %623 = vmatprep.subr.bf16.mxu0 0
    %624 = vmatpush1.bf16.msra.mxu0 %v604
    %625 = vmatprep.subr.bf16.mxu0 0
    %626 = vmatpush1.bf16.msra.mxu0 %v605
    %627 = vmatprep.subr.bf16.mxu0 0
    %628 = vmatpush1.bf16.msra.mxu0 %v606
    %629 = vmatprep.subr.bf16.mxu0 0
    %630 = vmatpush1.bf16.msra.mxu0 %v607
    %631 = vmatprep.subr.bf16.mxu0 0
    %632 = vmatpush1.bf16.msra.mxu0 %v608
    %633 = vmatprep.subr.bf16.mxu0 0
    %634 = vmatpush1.bf16.msra.mxu0 0
    %635 = vmatprep.subr.bf16.mxu0 0
    %636 = vmatpush1.bf16.msra.mxu0 0
    %637 = vmatprep.subr.bf16.mxu0 0
    %638 = vmatpush1.bf16.msra.mxu0 0
    %639 = vmatprep.subr.bf16.mxu0 0
    %640 = vmatpush1.bf16.msra.mxu0 0
    %641 = vmatprep.subr.bf16.mxu0 0
    %642 = vmatpush1.bf16.msra.mxu0 0
    %643 = vmatprep.subr.bf16.mxu0 0
    %644 = vmatpush1.bf16.msra.mxu0 0
    %645 = vmatprep.subr.bf16.mxu0 0
    %646 = vmatpush1.bf16.msra.mxu0 0
    %647 = vmatprep.subr.bf16.mxu0 0
    %648 = vmatpush1.bf16.msra.mxu0 0
    %649 = vmatprep.mubr.bf16.mxu0 0
    %650 = vmatmul.mubr.bf16.gmra.mrb[0].mxu0 %v551
    %v651 = vpop.f32.mrb[0].mxu0
    %v652 = vadd.f32 0.0, %v651
    %v653 = vpop.f32.mrb[0].mxu0
    %v654 = vpop.f32.mrb[0].mxu0
    %v655 = vadd.f32 0.0, %v654
    %v656 = vpop.f32.mrb[0].mxu0
    %657 = vdwg.mxu0
    %v658 = vpack.c.bf16 %v655, %v652
    %s659 = scalar_lea.vmem %s3, 1
    %v660 = vld [vmem:[%s659] sm:$0x1]
    %661 = vmatprep.subr.bf16.mxu0 0
    %662 = vmatpush1.bf16.xpose.msra.mxu0 %v658
    %663 = vmatprep.subr.bf16.mxu0 0
    %664 = vmatpush1.bf16.xpose.msra.mxu0 0
    %665 = vmatprep.subr.bf16.mxu0 0
    %666 = vmatpush1.bf16.xpose.msra.mxu0 0
    %667 = vmatprep.subr.bf16.mxu0 0
    %668 = vmatpush1.bf16.xpose.msra.mxu0 0
    %669 = vmatprep.subr.bf16.mxu0 0
    %670 = vmatpush1.bf16.xpose.msra.mxu0 0
    %671 = vmatprep.subr.bf16.mxu0 0
    %672 = vmatpush1.bf16.xpose.msra.mxu0 0
    %673 = vmatprep.subr.bf16.mxu0 0
    %674 = vmatpush1.bf16.xpose.msra.mxu0 0
    %675 = vmatprep.subr.bf16.mxu0 0
    %676 = vmatpush1.bf16.xpose.msra.mxu0 0
    %677 = vmatprep.subr.bf16.mxu0 0
    %678 = vmatpush1.bf16.xpose.msra.mxu0 0
    %679 = vmatprep.subr.bf16.mxu0 0
    %680 = vmatpush1.bf16.xpose.msra.mxu0 0
    %681 = vmatprep.subr.bf16.mxu0 0
    %682 = vmatpush1.bf16.xpose.msra.mxu0 0
    %683 = vmatprep.subr.bf16.mxu0 0
    %684 = vmatpush1.bf16.xpose.msra.mxu0 0
    %685 = vmatprep.subr.bf16.mxu0 0
    %686 = vmatpush1.bf16.xpose.msra.mxu0 0
    %687 = vmatprep.subr.bf16.mxu0 0
    %688 = vmatpush1.bf16.xpose.msra.mxu0 0
    %689 = vmatprep.subr.bf16.mxu0 0
    %690 = vmatpush1.bf16.xpose.msra.mxu0 0
    %691 = vmatprep.subr.bf16.mxu0 0
    %692 = vmatpush1.bf16.xpose.msra.mxu0 0
    %693 = vmatprep.mubr.bf16.mxu0 0
    %694 = vmatmul.mubr.bf16.gmra.mrb[0].mxu0 %v660
    %v695 = vpop.f32.mrb[0].mxu0
    %v696 = vadd.f32 0.0, %v695
    %v697 = vpop.f32.mrb[0].mxu0
    %v698 = vpop.f32.mrb[0].mxu0
    %v699 = vpop.f32.mrb[0].mxu0
    %700 = vdwg.mxu0
    %s701 = scalar_lea.vmem [#allocation8], 1
    %v702 = vld [vmem:[%s701] sm:$0x1]
    %703 = vmatprep.subr.bf16.mxu0 0
    %704 = vmatpush1.bf16.xpose.msra.mxu0 %v658
    %705 = vmatprep.subr.bf16.mxu0 0
    %706 = vmatpush1.bf16.xpose.msra.mxu0 0
    %707 = vmatprep.subr.bf16.mxu0 0
    %708 = vmatpush1.bf16.xpose.msra.mxu0 0
    %709 = vmatprep.subr.bf16.mxu0 0
    %710 = vmatpush1.bf16.xpose.msra.mxu0 0
    %711 = vmatprep.subr.bf16.mxu0 0
    %712 = vmatpush1.bf16.xpose.msra.mxu0 0
    %713 = vmatprep.subr.bf16.mxu0 0
    %714 = vmatpush1.bf16.xpose.msra.mxu0 0
    %715 = vmatprep.subr.bf16.mxu0 0
    %716 = vmatpush1.bf16.xpose.msra.mxu0 0
    %717 = vmatprep.subr.bf16.mxu0 0
    %718 = vmatpush1.bf16.xpose.msra.mxu0 0
    %719 = vmatprep.subr.bf16.mxu0 0
    %720 = vmatpush1.bf16.xpose.msra.mxu0 0
    %721 = vmatprep.subr.bf16.mxu0 0
    %722 = vmatpush1.bf16.xpose.msra.mxu0 0
    %723 = vmatprep.subr.bf16.mxu0 0
    %724 = vmatpush1.bf16.xpose.msra.mxu0 0
    %725 = vmatprep.subr.bf16.mxu0 0
    %726 = vmatpush1.bf16.xpose.msra.mxu0 0
    %727 = vmatprep.subr.bf16.mxu0 0
    %728 = vmatpush1.bf16.xpose.msra.mxu0 0
    %729 = vmatprep.subr.bf16.mxu0 0
    %730 = vmatpush1.bf16.xpose.msra.mxu0 0
    %731 = vmatprep.subr.bf16.mxu0 0
    %732 = vmatpush1.bf16.xpose.msra.mxu0 0
    %733 = vmatprep.subr.bf16.mxu0 0
    %734 = vmatpush1.bf16.xpose.msra.mxu0 0
    %735 = vmatprep.mubr.bf16.mxu0 0
    %736 = vmatmul.mubr.bf16.gmra.mrb[0].mxu0 %v702
    %v737 = vpop.f32.mrb[0].mxu0
    %v738 = vadd.f32 0.0, %v737
    %v739 = vpop.f32.mrb[0].mxu0
    %v740 = vpop.f32.mrb[0].mxu0
    %v741 = vpop.f32.mrb[0].mxu0
    %742 = vdwg.mxu0
    %v743 = vlaneseq
    %v744 = vshrl.u32 %v743, 7
    %v745 = vsub.s32 0, %v744
    %v746 = vrot.slane %v738, %v745
    %748 = vbcast.lane.b32.xlu0 %v746, 256
    %v749 = vpop.permute.xlu0 %748
    %s751 = sor.u32 256, 8
    %752 = vbcast.lane.b32.xlu0 %v746, %s751
    %v753 = vpop.permute.xlu0 %752
    %v754 = vlaneseq
    %v755 = vshrl.u32 %v754, 7
    %v756 = vsub.s32 1, %v755
    %v757 = vrot.slane %v738, %v756
    %759 = vbcast.lane.b32.xlu0 %v757, 256
    %v760 = vpop.permute.xlu0 %759
    %s762 = sor.u32 256, 8
    %763 = vbcast.lane.b32.xlu0 %v757, %s762
    %v764 = vpop.permute.xlu0 %763
    %v767 = vunpack.c.l.s4 1966171168
    %v768 = vunpack.c.0.s8 %v767
    %v769 = vlaneseq
    %v770 = vshrl.u32 %v769, 7
    %v771 = vsub.s32 %v768, %v770
    %v772 = vrot.slane %v696, %v771
    %v773 = vcombine.high %v772, %v772
    %v775 = vunpack.c.l.s4 1966171168
    %v776 = vunpack.c.0.s8 %v775
    %v777 = vlaneseq
    %v778 = vshrl.u32 %v777, 7
    %v779 = vsub.s32 %v776, %v778
    %v780 = vrot.slane %v772, %v779
    %v782 = vunpack.c.l.s4 1966171168
    %v783 = vunpack.c.0.s8 %v782
    %v784 = vlaneseq
    %v785 = vshrl.u32 %v784, 7
    %v786 = vsub.s32 %v783, %v785
    %v787 = vrot.slane %v773, %v786
    %v788 = vlaneseq
    %v789 = vshrl.u32 %v788, 7
    %v790 = vsub.s32 0, %v789
    %v791 = vrot.slane %v780, %v790
    %v792 = vlaneseq
    %v793 = vshrl.u32 %v792, 7
    %v794 = vsub.s32 0, %v793
    %v795 = vrot.slane %v787, %v794
    %v798 = vadd.f32 %v749, %v791
    %v799 = vadd.f32 %v753, %v791
    %v800 = vadd.f32 %v760, %v795
    %v801 = vadd.f32 %v764, %v795
    %vm802 = vcmp.gt.f32.partialorder %v798, 0.0
    %vm803 = vcmp.gt.f32.partialorder %v799, 0.0
    %vm804 = vcmp.gt.f32.partialorder %v800, 0.0
    %vm805 = vcmp.gt.f32.partialorder %v801, 0.0
    %v806 = vmul.f32 %v798, 0.2
    %v807 = vmul.f32 %v799, 0.2
    %v808 = vmul.f32 %v800, 0.2
    %v809 = vmul.f32 %v801, 0.2
    %v810 = vsel %vm802, %v798, %v806
    %v811 = vsel %vm803, %v799, %v807
    %v812 = vsel %vm804, %v800, %v808
    %v813 = vsel %vm805, %v801, %v809
    %v814 = vsel %vm374, %v810, -1e+30
    %v815 = vsel %vm375, %v811, -1e+30
    %v816 = vsel %vm374, %v812, -1e+30
    %v817 = vsel %vm375, %v813, -1e+30
    %v818 = vsel %vm380, %v814, -inf
    %819 = vmax.xlane.f32.xlu0 %v818
    %v820 = vpop.xlane.xlu0 %819
    %v821 = vsel %vm380, %v815, -inf
    %822 = vmax.xlane.f32.xlu0 %v821
    %v823 = vpop.xlane.xlu0 %822
    %v824 = vsel %vm380, %v816, -inf
    %825 = vmax.xlane.f32.xlu0 %v824
    %v826 = vpop.xlane.xlu0 %825
    %v827 = vsel %vm380, %v817, -inf
    %828 = vmax.xlane.f32.xlu0 %v827
    %v829 = vpop.xlane.xlu0 %828
    %v830 = vsub.f32 %v814, %v820
    %v831 = vsub.f32 %v815, %v823
    %v832 = vsub.f32 %v816, %v826
    %v833 = vsub.f32 %v817, %v829
    %v834 = vmul.f32 %v830, 1.442695
    %v835 = vpow.pop %v834
    %v836 = vmul.f32 %v831, 1.442695
    %v837 = vpow.pop %v836
    %v838 = vmul.f32 %v832, 1.442695
    %v839 = vpow.pop %v838
    %v840 = vmul.f32 %v833, 1.442695
    %v841 = vpow.pop %v840
    %v842 = vsel %vm380, %v835, 0.0
    %843 = vadd.xlane.f32.xlu0 %v842
    %v844 = vpop.xlane.xlu0 %843
    %v845 = vsel %vm380, %v837, 0.0
    %846 = vadd.xlane.f32.xlu0 %v845
    %v847 = vpop.xlane.xlu0 %846
    %v848 = vsel %vm380, %v839, 0.0
    %849 = vadd.xlane.f32.xlu0 %v848
    %v850 = vpop.xlane.xlu0 %849
    %v851 = vsel %vm380, %v841, 0.0
    %852 = vadd.xlane.f32.xlu0 %v851
    %v853 = vpop.xlane.xlu0 %852
    %v854 = vrcp.pop %v844
    %v855 = vrcp.pop %v847
    %v856 = vrcp.pop %v850
    %v857 = vrcp.pop %v853
    %v858 = vmul.f32 %v835, %v854
    %v859 = vmul.f32 %v837, %v855
    %v860 = vmul.f32 %v839, %v856
    %v861 = vmul.f32 %v841, %v857
    %v862 = vpack.c.bf16 %v859, %v858
    %v863 = vpack.c.bf16 %v861, %v860
    %v865 = vsel %vm380, %v862, 0
    %867 = vmatprep.subr.bf16.mxu0 0
    %868 = vmatpush1.bf16.msra.mxu0 %v658
    %869 = vmatprep.subr.bf16.mxu0 0
    %870 = vmatpush1.bf16.msra.mxu0 0
    %871 = vmatprep.subr.bf16.mxu0 0
    %872 = vmatpush1.bf16.msra.mxu0 0
    %873 = vmatprep.subr.bf16.mxu0 0
    %874 = vmatpush1.bf16.msra.mxu0 0
    %875 = vmatprep.subr.bf16.mxu0 0
    %876 = vmatpush1.bf16.msra.mxu0 0
    %877 = vmatprep.subr.bf16.mxu0 0
    %878 = vmatpush1.bf16.msra.mxu0 0
    %879 = vmatprep.subr.bf16.mxu0 0
    %880 = vmatpush1.bf16.msra.mxu0 0
    %881 = vmatprep.subr.bf16.mxu0 0
    %882 = vmatpush1.bf16.msra.mxu0 0
    %883 = vmatprep.subr.bf16.mxu0 0
    %884 = vmatpush1.bf16.msra.mxu0 0
    %885 = vmatprep.subr.bf16.mxu0 0
    %886 = vmatpush1.bf16.msra.mxu0 0
    %887 = vmatprep.subr.bf16.mxu0 0
    %888 = vmatpush1.bf16.msra.mxu0 0
    %889 = vmatprep.subr.bf16.mxu0 0
    %890 = vmatpush1.bf16.msra.mxu0 0
    %891 = vmatprep.subr.bf16.mxu0 0
    %892 = vmatpush1.bf16.msra.mxu0 0
    %893 = vmatprep.subr.bf16.mxu0 0
    %894 = vmatpush1.bf16.msra.mxu0 0
    %895 = vmatprep.subr.bf16.mxu0 0
    %896 = vmatpush1.bf16.msra.mxu0 0
    %897 = vmatprep.subr.bf16.mxu0 0
    %898 = vmatpush1.bf16.msra.mxu0 0
    %899 = vmatprep.mubr.bf16.mxu0 0
    %900 = vmatmul.mubr.bf16.gmra.mrb[0].mxu0 %v865
    %v901 = vpop.f32.mrb[0].mxu0
    %v902 = vadd.f32 0.0, %v901
    %v903 = vpop.f32.mrb[0].mxu0
    %v904 = vpop.f32.mrb[0].mxu0
    %v905 = vadd.f32 0.0, %v904
    %v906 = vpop.f32.mrb[0].mxu0
    %907 = vdwg.mxu0
    %v909 = vsel %vm380, %v863, 0
    %911 = vmatprep.subr.bf16.mxu0 0
    %912 = vmatpush1.bf16.msra.mxu0 %v658
    %913 = vmatprep.subr.bf16.mxu0 0
    %914 = vmatpush1.bf16.msra.mxu0 0
    %915 = vmatprep.subr.bf16.mxu0 0
    %916 = vmatpush1.bf16.msra.mxu0 0
    %917 = vmatprep.subr.bf16.mxu0 0
    %918 = vmatpush1.bf16.msra.mxu0 0
    %919 = vmatprep.subr.bf16.mxu0 0
    %920 = vmatpush1.bf16.msra.mxu0 0
    %921 = vmatprep.subr.bf16.mxu0 0
    %922 = vmatpush1.bf16.msra.mxu0 0
    %923 = vmatprep.subr.bf16.mxu0 0
    %924 = vmatpush1.bf16.msra.mxu0 0
    %925 = vmatprep.subr.bf16.mxu0 0
    %926 = vmatpush1.bf16.msra.mxu0 0
    %927 = vmatprep.subr.bf16.mxu0 0
    %928 = vmatpush1.bf16.msra.mxu0 0
    %929 = vmatprep.subr.bf16.mxu0 0
    %930 = vmatpush1.bf16.msra.mxu0 0
    %931 = vmatprep.subr.bf16.mxu0 0
    %932 = vmatpush1.bf16.msra.mxu0 0
    %933 = vmatprep.subr.bf16.mxu0 0
    %934 = vmatpush1.bf16.msra.mxu0 0
    %935 = vmatprep.subr.bf16.mxu0 0
    %936 = vmatpush1.bf16.msra.mxu0 0
    %937 = vmatprep.subr.bf16.mxu0 0
    %938 = vmatpush1.bf16.msra.mxu0 0
    %939 = vmatprep.subr.bf16.mxu0 0
    %940 = vmatpush1.bf16.msra.mxu0 0
    %941 = vmatprep.subr.bf16.mxu0 0
    %942 = vmatpush1.bf16.msra.mxu0 0
    %943 = vmatprep.mubr.bf16.mxu0 0
    %944 = vmatmul.mubr.bf16.gmra.mrb[0].mxu0 %v909
    %v945 = vpop.f32.mrb[0].mxu0
    %v946 = vadd.f32 0.0, %v945
    %v947 = vpop.f32.mrb[0].mxu0
    %v948 = vpop.f32.mrb[0].mxu0
    %v949 = vadd.f32 0.0, %v948
    %v950 = vpop.f32.mrb[0].mxu0
    %951 = vdwg.mxu0
    %s952 = scalar_lea.vmem %s6, 2
    %v953 = vld [vmem:[%s952] sm:$0x3]
    %v954 = vlaneseq
    %v955 = vshrl.u32 %v954, 7
    %v956 = vsub.s32 0, %v955
    %v957 = vrot.slane %v953, %v956
    %v958 = vmul.f32 %v902, %v957
    %v959 = vmul.f32 %v905, %v957
    %v960 = vlaneseq
    %v961 = vshrl.u32 %v960, 7
    %v962 = vsub.s32 1, %v961
    %v963 = vrot.slane %v953, %v962
    %v964 = vmul.f32 %v946, %v963
    %v965 = vmul.f32 %v949, %v963
    %v966 = vadd.f32 %v958, %v964
    %v967 = vadd.f32 %v959, %v965
    %s968 = scalar_lea.vmem %s5, 1
    %v969 = vld [vmem:[%s968] sm:$0x1]
    %v971 = vlaneseq
    %v972 = vshrl.u32 %v971, 7
    %v973 = vsub.s32 0, %v972
    %v974 = vrot.slane %v969, %v973
    %v976 = vadd.f32 %v966, %v974
    %v977 = vadd.f32 %v967, %v974
    %vm978 = vcmp.gt.f32.partialorder %v976, 0.0
    %vm979 = vcmp.gt.f32.partialorder %v977, 0.0
    %v980 = vmin.f32 %v976, 0.0
    %v981 = vmin.f32 %v977, 0.0
    %v982 = vmul.f32 %v980, 1.442695
    %v983 = vpow.pop %v982
    %v984 = vmul.f32 %v981, 1.442695
    %v985 = vpow.pop %v984
    %v986 = vsub.f32 %v983, 1.0
    %v987 = vsub.f32 %v985, 1.0
    %v988 = vsel %vm978, %v976, %v986
    %v989 = vsel %vm979, %v977, %v987
    %v990 = vpack.c.bf16 %v989, %v988
    %s991 = scalar_lea.vmem [#allocation7], 128
    %v992 = vld [vmem:[%s991] sm:$0xf]
    %v993 = vld [vmem:[%s991 + $0x4] sm:$0xf]
    %v994 = vld [vmem:[%s991 + $0x8] sm:$0xf]
    %v995 = vld [vmem:[%s991 + $0xc] sm:$0xf]
    %v996 = vld [vmem:[%s991 + $0x10] sm:$0xf]
    %v997 = vld [vmem:[%s991 + $0x14] sm:$0xf]
    %v998 = vld [vmem:[%s991 + $0x18] sm:$0xf]
    %v999 = vld [vmem:[%s991 + $0x1c] sm:$0xf]
    %v1000 = vld [vmem:[%s991 + $0x20] sm:$0xf]
    %v1001 = vld [vmem:[%s991 + $0x24] sm:$0xf]
    %v1002 = vld [vmem:[%s991 + $0x28] sm:$0xf]
    %v1003 = vld [vmem:[%s991 + $0x2c] sm:$0xf]
    %v1004 = vld [vmem:[%s991 + $0x30] sm:$0xf]
    %v1005 = vld [vmem:[%s991 + $0x34] sm:$0xf]
    %v1006 = vld [vmem:[%s991 + $0x38] sm:$0xf]
    %v1007 = vld [vmem:[%s991 + $0x3c] sm:$0xf]
    %v1024 = vunpack.c.l.b16 %v992
    %v1025 = vunpack.c.l.b16 %v993
    %v1026 = vunpack.c.l.b16 %v994
    %v1027 = vunpack.c.l.b16 %v995
    %v1028 = vunpack.c.l.b16 %v996
    %v1029 = vunpack.c.l.b16 %v997
    %v1030 = vunpack.c.l.b16 %v998
    %v1031 = vunpack.c.l.b16 %v999
    %v1032 = vunpack.c.l.b16 %v1000
    %v1033 = vunpack.c.l.b16 %v1001
    %v1034 = vunpack.c.l.b16 %v1002
    %v1035 = vunpack.c.l.b16 %v1003
    %v1036 = vunpack.c.l.b16 %v1004
    %v1037 = vunpack.c.l.b16 %v1005
    %v1038 = vunpack.c.l.b16 %v1006
    %v1039 = vunpack.c.l.b16 %v1007
    %v1040 = vpack.c.b16 %v1025, %v1024
    %v1041 = vpack.c.b16 %v1027, %v1026
    %v1042 = vpack.c.b16 %v1029, %v1028
    %v1043 = vpack.c.b16 %v1031, %v1030
    %v1044 = vpack.c.b16 %v1033, %v1032
    %v1045 = vpack.c.b16 %v1035, %v1034
    %v1046 = vpack.c.b16 %v1037, %v1036
    %v1047 = vpack.c.b16 %v1039, %v1038
    %1056 = vmatprep.subr.bf16.mxu0 0
    %1057 = vmatpush1.bf16.msra.mxu0 %v1040
    %1058 = vmatprep.subr.bf16.mxu0 0
    %1059 = vmatpush1.bf16.msra.mxu0 %v1041
    %1060 = vmatprep.subr.bf16.mxu0 0
    %1061 = vmatpush1.bf16.msra.mxu0 %v1042
    %1062 = vmatprep.subr.bf16.mxu0 0
    %1063 = vmatpush1.bf16.msra.mxu0 %v1043
    %1064 = vmatprep.subr.bf16.mxu0 0
    %1065 = vmatpush1.bf16.msra.mxu0 %v1044
    %1066 = vmatprep.subr.bf16.mxu0 0
    %1067 = vmatpush1.bf16.msra.mxu0 %v1045
    %1068 = vmatprep.subr.bf16.mxu0 0
    %1069 = vmatpush1.bf16.msra.mxu0 %v1046
    %1070 = vmatprep.subr.bf16.mxu0 0
    %1071 = vmatpush1.bf16.msra.mxu0 %v1047
    %1072 = vmatprep.subr.bf16.mxu0 0
    %1073 = vmatpush1.bf16.msra.mxu0 0
    %1074 = vmatprep.subr.bf16.mxu0 0
    %1075 = vmatpush1.bf16.msra.mxu0 0
    %1076 = vmatprep.subr.bf16.mxu0 0
    %1077 = vmatpush1.bf16.msra.mxu0 0
    %1078 = vmatprep.subr.bf16.mxu0 0
    %1079 = vmatpush1.bf16.msra.mxu0 0
    %1080 = vmatprep.subr.bf16.mxu0 0
    %1081 = vmatpush1.bf16.msra.mxu0 0
    %1082 = vmatprep.subr.bf16.mxu0 0
    %1083 = vmatpush1.bf16.msra.mxu0 0
    %1084 = vmatprep.subr.bf16.mxu0 0
    %1085 = vmatpush1.bf16.msra.mxu0 0
    %1086 = vmatprep.subr.bf16.mxu0 0
    %1087 = vmatpush1.bf16.msra.mxu0 0
    %1088 = vmatprep.mubr.bf16.mxu0 0
    %1089 = vmatmul.mubr.bf16.gmra.mrb[0].mxu0 %v990
    %v1090 = vpop.f32.mrb[0].mxu0
    %v1091 = vadd.f32 0.0, %v1090
    %v1092 = vpop.f32.mrb[0].mxu0
    %v1093 = vpop.f32.mrb[0].mxu0
    %v1094 = vadd.f32 0.0, %v1093
    %v1095 = vpop.f32.mrb[0].mxu0
    %1096 = vdwg.mxu0
    %v1097 = vpack.c.bf16 %v1094, %v1091
    %s1098 = scalar_lea.vmem %s3, 2
    %v1099 = vld [vmem:[%s1098] sm:$0x1]
    %1100 = vmatprep.subr.bf16.mxu0 0
    %1101 = vmatpush1.bf16.xpose.msra.mxu0 %v1097
    %1102 = vmatprep.subr.bf16.mxu0 0
    %1103 = vmatpush1.bf16.xpose.msra.mxu0 0
    %1104 = vmatprep.subr.bf16.mxu0 0
    %1105 = vmatpush1.bf16.xpose.msra.mxu0 0
    %1106 = vmatprep.subr.bf16.mxu0 0
    %1107 = vmatpush1.bf16.xpose.msra.mxu0 0
    %1108 = vmatprep.subr.bf16.mxu0 0
    %1109 = vmatpush1.bf16.xpose.msra.mxu0 0
    %1110 = vmatprep.subr.bf16.mxu0 0
    %1111 = vmatpush1.bf16.xpose.msra.mxu0 0
    %1112 = vmatprep.subr.bf16.mxu0 0
    %1113 = vmatpush1.bf16.xpose.msra.mxu0 0
    %1114 = vmatprep.subr.bf16.mxu0 0
    %1115 = vmatpush1.bf16.xpose.msra.mxu0 0
    %1116 = vmatprep.subr.bf16.mxu0 0
    %1117 = vmatpush1.bf16.xpose.msra.mxu0 0
    %1118 = vmatprep.subr.bf16.mxu0 0
    %1119 = vmatpush1.bf16.xpose.msra.mxu0 0
    %1120 = vmatprep.subr.bf16.mxu0 0
    %1121 = vmatpush1.bf16.xpose.msra.mxu0 0
    %1122 = vmatprep.subr.bf16.mxu0 0
    %1123 = vmatpush1.bf16.xpose.msra.mxu0 0
    %1124 = vmatprep.subr.bf16.mxu0 0
    %1125 = vmatpush1.bf16.xpose.msra.mxu0 0
    %1126 = vmatprep.subr.bf16.mxu0 0
    %1127 = vmatpush1.bf16.xpose.msra.mxu0 0
    %1128 = vmatprep.subr.bf16.mxu0 0
    %1129 = vmatpush1.bf16.xpose.msra.mxu0 0
    %1130 = vmatprep.subr.bf16.mxu0 0
    %1131 = vmatpush1.bf16.xpose.msra.mxu0 0
    %1132 = vmatprep.mubr.bf16.mxu0 0
    %1133 = vmatmul.mubr.bf16.gmra.mrb[0].mxu0 %v1099
    %v1134 = vpop.f32.mrb[0].mxu0
    %v1135 = vadd.f32 0.0, %v1134
    %v1136 = vpop.f32.mrb[0].mxu0
    %v1137 = vpop.f32.mrb[0].mxu0
    %v1138 = vpop.f32.mrb[0].mxu0
    %1139 = vdwg.mxu0
    %s1140 = scalar_lea.vmem [#allocation8], 2
    %v1141 = vld [vmem:[%s1140] sm:$0x1]
    %1142 = vmatprep.subr.bf16.mxu0 0
    %1143 = vmatpush1.bf16.xpose.msra.mxu0 %v1097
    %1144 = vmatprep.subr.bf16.mxu0 0
    %1145 = vmatpush1.bf16.xpose.msra.mxu0 0
    %1146 = vmatprep.subr.bf16.mxu0 0
    %1147 = vmatpush1.bf16.xpose.msra.mxu0 0
    %1148 = vmatprep.subr.bf16.mxu0 0
    %1149 = vmatpush1.bf16.xpose.msra.mxu0 0
    %1150 = vmatprep.subr.bf16.mxu0 0
    %1151 = vmatpush1.bf16.xpose.msra.mxu0 0
    %1152 = vmatprep.subr.bf16.mxu0 0
    %1153 = vmatpush1.bf16.xpose.msra.mxu0 0
    %1154 = vmatprep.subr.bf16.mxu0 0
    %1155 = vmatpush1.bf16.xpose.msra.mxu0 0
    %1156 = vmatprep.subr.bf16.mxu0 0
    %1157 = vmatpush1.bf16.xpose.msra.mxu0 0
    %1158 = vmatprep.subr.bf16.mxu0 0
    %1159 = vmatpush1.bf16.xpose.msra.mxu0 0
    %1160 = vmatprep.subr.bf16.mxu0 0
    %1161 = vmatpush1.bf16.xpose.msra.mxu0 0
    %1162 = vmatprep.subr.bf16.mxu0 0
    %1163 = vmatpush1.bf16.xpose.msra.mxu0 0
    %1164 = vmatprep.subr.bf16.mxu0 0
    %1165 = vmatpush1.bf16.xpose.msra.mxu0 0
    %1166 = vmatprep.subr.bf16.mxu0 0
    %1167 = vmatpush1.bf16.xpose.msra.mxu0 0
    %1168 = vmatprep.subr.bf16.mxu0 0
    %1169 = vmatpush1.bf16.xpose.msra.mxu0 0
    %1170 = vmatprep.subr.bf16.mxu0 0
    %1171 = vmatpush1.bf16.xpose.msra.mxu0 0
    %1172 = vmatprep.subr.bf16.mxu0 0
    %1173 = vmatpush1.bf16.xpose.msra.mxu0 0
    %1174 = vmatprep.mubr.bf16.mxu0 0
    %1175 = vmatmul.mubr.bf16.gmra.mrb[0].mxu0 %v1141
    %v1176 = vpop.f32.mrb[0].mxu0
    %v1177 = vadd.f32 0.0, %v1176
    %v1178 = vpop.f32.mrb[0].mxu0
    %v1179 = vpop.f32.mrb[0].mxu0
    %v1180 = vpop.f32.mrb[0].mxu0
    %1181 = vdwg.mxu0
    %v1182 = vlaneseq
    %v1183 = vshrl.u32 %v1182, 7
    %v1184 = vsub.s32 0, %v1183
    %v1185 = vrot.slane %v1177, %v1184
    %1187 = vbcast.lane.b32.xlu0 %v1185, 256
    %v1188 = vpop.permute.xlu0 %1187
    %s1190 = sor.u32 256, 8
    %1191 = vbcast.lane.b32.xlu0 %v1185, %s1190
    %v1192 = vpop.permute.xlu0 %1191
    %v1193 = vlaneseq
    %v1194 = vshrl.u32 %v1193, 7
    %v1195 = vsub.s32 1, %v1194
    %v1196 = vrot.slane %v1177, %v1195
    %1198 = vbcast.lane.b32.xlu0 %v1196, 256
    %v1199 = vpop.permute.xlu0 %1198
    %s1201 = sor.u32 256, 8
    %1202 = vbcast.lane.b32.xlu0 %v1196, %s1201
    %v1203 = vpop.permute.xlu0 %1202
    %v1206 = vunpack.c.l.s4 1966171168
    %v1207 = vunpack.c.0.s8 %v1206
    %v1208 = vlaneseq
    %v1209 = vshrl.u32 %v1208, 7
    %v1210 = vsub.s32 %v1207, %v1209
    %v1211 = vrot.slane %v1135, %v1210
    %v1212 = vcombine.high %v1211, %v1211
    %v1214 = vunpack.c.l.s4 1966171168
    %v1215 = vunpack.c.0.s8 %v1214
    %v1216 = vlaneseq
    %v1217 = vshrl.u32 %v1216, 7
    %v1218 = vsub.s32 %v1215, %v1217
    %v1219 = vrot.slane %v1211, %v1218
    %v1221 = vunpack.c.l.s4 1966171168
    %v1222 = vunpack.c.0.s8 %v1221
    %v1223 = vlaneseq
    %v1224 = vshrl.u32 %v1223, 7
    %v1225 = vsub.s32 %v1222, %v1224
    %v1226 = vrot.slane %v1212, %v1225
    %v1227 = vlaneseq
    %v1228 = vshrl.u32 %v1227, 7
    %v1229 = vsub.s32 0, %v1228
    %v1230 = vrot.slane %v1219, %v1229
    %v1231 = vlaneseq
    %v1232 = vshrl.u32 %v1231, 7
    %v1233 = vsub.s32 0, %v1232
    %v1234 = vrot.slane %v1226, %v1233
    %v1237 = vadd.f32 %v1188, %v1230
    %v1238 = vadd.f32 %v1192, %v1230
    %v1239 = vadd.f32 %v1199, %v1234
    %v1240 = vadd.f32 %v1203, %v1234
    %vm1241 = vcmp.gt.f32.partialorder %v1237, 0.0
    %vm1242 = vcmp.gt.f32.partialorder %v1238, 0.0
    %vm1243 = vcmp.gt.f32.partialorder %v1239, 0.0
    %vm1244 = vcmp.gt.f32.partialorder %v1240, 0.0
    %v1245 = vmul.f32 %v1237, 0.2
    %v1246 = vmul.f32 %v1238, 0.2
    %v1247 = vmul.f32 %v1239, 0.2
    %v1248 = vmul.f32 %v1240, 0.2
    %v1249 = vsel %vm1241, %v1237, %v1245
    %v1250 = vsel %vm1242, %v1238, %v1246
    %v1251 = vsel %vm1243, %v1239, %v1247
    %v1252 = vsel %vm1244, %v1240, %v1248
    %v1253 = vsel %vm374, %v1249, -1e+30
    %v1254 = vsel %vm375, %v1250, -1e+30
    %v1255 = vsel %vm374, %v1251, -1e+30
    %v1256 = vsel %vm375, %v1252, -1e+30
    %v1257 = vsel %vm380, %v1253, -inf
    %1258 = vmax.xlane.f32.xlu0 %v1257
    %v1259 = vpop.xlane.xlu0 %1258
    %v1260 = vsel %vm380, %v1254, -inf
    %1261 = vmax.xlane.f32.xlu0 %v1260
    %v1262 = vpop.xlane.xlu0 %1261
    %v1263 = vsel %vm380, %v1255, -inf
    %1264 = vmax.xlane.f32.xlu0 %v1263
    %v1265 = vpop.xlane.xlu0 %1264
    %v1266 = vsel %vm380, %v1256, -inf
    %1267 = vmax.xlane.f32.xlu0 %v1266
    %v1268 = vpop.xlane.xlu0 %1267
    %v1269 = vsub.f32 %v1253, %v1259
    %v1270 = vsub.f32 %v1254, %v1262
    %v1271 = vsub.f32 %v1255, %v1265
    %v1272 = vsub.f32 %v1256, %v1268
    %v1273 = vmul.f32 %v1269, 1.442695
    %v1274 = vpow.pop %v1273
    %v1275 = vmul.f32 %v1270, 1.442695
    %v1276 = vpow.pop %v1275
    %v1277 = vmul.f32 %v1271, 1.442695
    %v1278 = vpow.pop %v1277
    %v1279 = vmul.f32 %v1272, 1.442695
    %v1280 = vpow.pop %v1279
    %v1281 = vsel %vm380, %v1274, 0.0
    %1282 = vadd.xlane.f32.xlu0 %v1281
    %v1283 = vpop.xlane.xlu0 %1282
    %v1284 = vsel %vm380, %v1276, 0.0
    %1285 = vadd.xlane.f32.xlu0 %v1284
    %v1286 = vpop.xlane.xlu0 %1285
    %v1287 = vsel %vm380, %v1278, 0.0
    %1288 = vadd.xlane.f32.xlu0 %v1287
    %v1289 = vpop.xlane.xlu0 %1288
    %v1290 = vsel %vm380, %v1280, 0.0
    %1291 = vadd.xlane.f32.xlu0 %v1290
    %v1292 = vpop.xlane.xlu0 %1291
    %v1293 = vrcp.pop %v1283
    %v1294 = vrcp.pop %v1286
    %v1295 = vrcp.pop %v1289
    %v1296 = vrcp.pop %v1292
    %v1297 = vmul.f32 %v1274, %v1293
    %v1298 = vmul.f32 %v1276, %v1294
    %v1299 = vmul.f32 %v1278, %v1295
    %v1300 = vmul.f32 %v1280, %v1296
    %v1301 = vpack.c.bf16 %v1298, %v1297
    %v1302 = vpack.c.bf16 %v1300, %v1299
    %v1304 = vsel %vm380, %v1301, 0
    %1306 = vmatprep.subr.bf16.mxu0 0
    %1307 = vmatpush1.bf16.msra.mxu0 %v1097
    %1308 = vmatprep.subr.bf16.mxu0 0
    %1309 = vmatpush1.bf16.msra.mxu0 0
    %1310 = vmatprep.subr.bf16.mxu0 0
    %1311 = vmatpush1.bf16.msra.mxu0 0
    %1312 = vmatprep.subr.bf16.mxu0 0
    %1313 = vmatpush1.bf16.msra.mxu0 0
    %1314 = vmatprep.subr.bf16.mxu0 0
    %1315 = vmatpush1.bf16.msra.mxu0 0
    %1316 = vmatprep.subr.bf16.mxu0 0
    %1317 = vmatpush1.bf16.msra.mxu0 0
    %1318 = vmatprep.subr.bf16.mxu0 0
    %1319 = vmatpush1.bf16.msra.mxu0 0
    %1320 = vmatprep.subr.bf16.mxu0 0
    %1321 = vmatpush1.bf16.msra.mxu0 0
    %1322 = vmatprep.subr.bf16.mxu0 0
    %1323 = vmatpush1.bf16.msra.mxu0 0
    %1324 = vmatprep.subr.bf16.mxu0 0
    %1325 = vmatpush1.bf16.msra.mxu0 0
    %1326 = vmatprep.subr.bf16.mxu0 0
    %1327 = vmatpush1.bf16.msra.mxu0 0
    %1328 = vmatprep.subr.bf16.mxu0 0
    %1329 = vmatpush1.bf16.msra.mxu0 0
    %1330 = vmatprep.subr.bf16.mxu0 0
    %1331 = vmatpush1.bf16.msra.mxu0 0
    %1332 = vmatprep.subr.bf16.mxu0 0
    %1333 = vmatpush1.bf16.msra.mxu0 0
    %1334 = vmatprep.subr.bf16.mxu0 0
    %1335 = vmatpush1.bf16.msra.mxu0 0
    %1336 = vmatprep.subr.bf16.mxu0 0
    %1337 = vmatpush1.bf16.msra.mxu0 0
    %1338 = vmatprep.mubr.bf16.mxu0 0
    %1339 = vmatmul.mubr.bf16.gmra.mrb[0].mxu0 %v1304
    %v1340 = vpop.f32.mrb[0].mxu0
    %v1341 = vadd.f32 0.0, %v1340
    %v1342 = vpop.f32.mrb[0].mxu0
    %v1343 = vpop.f32.mrb[0].mxu0
    %v1344 = vadd.f32 0.0, %v1343
    %v1345 = vpop.f32.mrb[0].mxu0
    %1346 = vdwg.mxu0
    %v1348 = vsel %vm380, %v1302, 0
    %1350 = vmatprep.subr.bf16.mxu0 0
    %1351 = vmatpush1.bf16.msra.mxu0 %v1097
    %1352 = vmatprep.subr.bf16.mxu0 0
    %1353 = vmatpush1.bf16.msra.mxu0 0
    %1354 = vmatprep.subr.bf16.mxu0 0
    %1355 = vmatpush1.bf16.msra.mxu0 0
    %1356 = vmatprep.subr.bf16.mxu0 0
    %1357 = vmatpush1.bf16.msra.mxu0 0
    %1358 = vmatprep.subr.bf16.mxu0 0
    %1359 = vmatpush1.bf16.msra.mxu0 0
    %1360 = vmatprep.subr.bf16.mxu0 0
    %1361 = vmatpush1.bf16.msra.mxu0 0
    %1362 = vmatprep.subr.bf16.mxu0 0
    %1363 = vmatpush1.bf16.msra.mxu0 0
    %1364 = vmatprep.subr.bf16.mxu0 0
    %1365 = vmatpush1.bf16.msra.mxu0 0
    %1366 = vmatprep.subr.bf16.mxu0 0
    %1367 = vmatpush1.bf16.msra.mxu0 0
    %1368 = vmatprep.subr.bf16.mxu0 0
    %1369 = vmatpush1.bf16.msra.mxu0 0
    %1370 = vmatprep.subr.bf16.mxu0 0
    %1371 = vmatpush1.bf16.msra.mxu0 0
    %1372 = vmatprep.subr.bf16.mxu0 0
    %1373 = vmatpush1.bf16.msra.mxu0 0
    %1374 = vmatprep.subr.bf16.mxu0 0
    %1375 = vmatpush1.bf16.msra.mxu0 0
    %1376 = vmatprep.subr.bf16.mxu0 0
    %1377 = vmatpush1.bf16.msra.mxu0 0
    %1378 = vmatprep.subr.bf16.mxu0 0
    %1379 = vmatpush1.bf16.msra.mxu0 0
    %1380 = vmatprep.subr.bf16.mxu0 0
    %1381 = vmatpush1.bf16.msra.mxu0 0
    %1382 = vmatprep.mubr.bf16.mxu0 0
    %1383 = vmatmul.mubr.bf16.gmra.mrb[0].mxu0 %v1348
    %v1384 = vpop.f32.mrb[0].mxu0
    %v1385 = vadd.f32 0.0, %v1384
    %v1386 = vpop.f32.mrb[0].mxu0
    %v1387 = vpop.f32.mrb[0].mxu0
    %v1388 = vadd.f32 0.0, %v1387
    %v1389 = vpop.f32.mrb[0].mxu0
    %1390 = vdwg.mxu0
    %s1391 = scalar_lea.vmem %s6, 4
    %v1392 = vld [vmem:[%s1391] sm:$0x3]
    %v1393 = vlaneseq
    %v1394 = vshrl.u32 %v1393, 7
    %v1395 = vsub.s32 0, %v1394
    %v1396 = vrot.slane %v1392, %v1395
    %v1397 = vmul.f32 %v1341, %v1396
    %v1398 = vmul.f32 %v1344, %v1396
    %v1399 = vlaneseq
    %v1400 = vshrl.u32 %v1399, 7
    %v1401 = vsub.s32 1, %v1400
    %v1402 = vrot.slane %v1392, %v1401
    %v1403 = vmul.f32 %v1385, %v1402
    %v1404 = vmul.f32 %v1388, %v1402
    %v1405 = vadd.f32 %v1397, %v1403
    %v1406 = vadd.f32 %v1398, %v1404
    %s1407 = scalar_lea.vmem %s5, 2
    %v1408 = vld [vmem:[%s1407] sm:$0x1]
    %v1410 = vlaneseq
    %v1411 = vshrl.u32 %v1410, 7
    %v1412 = vsub.s32 0, %v1411
    %v1413 = vrot.slane %v1408, %v1412
    %v1415 = vadd.f32 %v1405, %v1413
    %v1416 = vadd.f32 %v1406, %v1413
    %vm1417 = vcmp.gt.f32.partialorder %v1415, 0.0
    %vm1418 = vcmp.gt.f32.partialorder %v1416, 0.0
    %v1419 = vmin.f32 %v1415, 0.0
    %v1420 = vmin.f32 %v1416, 0.0
    %v1421 = vmul.f32 %v1419, 1.442695
    %v1422 = vpow.pop %v1421
    %v1423 = vmul.f32 %v1420, 1.442695
    %v1424 = vpow.pop %v1423
    %v1425 = vsub.f32 %v1422, 1.0
    %v1426 = vsub.f32 %v1424, 1.0
    %v1427 = vsel %vm1417, %v1415, %v1425
    %v1428 = vsel %vm1418, %v1416, %v1426
    %v1429 = vpack.c.bf16 %v1428, %v1427
    %s1430 = scalar_lea.vmem [#allocation7], 192
    %v1431 = vld [vmem:[%s1430] sm:$0xf]
    %v1432 = vld [vmem:[%s1430 + $0x4] sm:$0xf]
    %v1433 = vld [vmem:[%s1430 + $0x8] sm:$0xf]
    %v1434 = vld [vmem:[%s1430 + $0xc] sm:$0xf]
    %v1435 = vld [vmem:[%s1430 + $0x10] sm:$0xf]
    %v1436 = vld [vmem:[%s1430 + $0x14] sm:$0xf]
    %v1437 = vld [vmem:[%s1430 + $0x18] sm:$0xf]
    %v1438 = vld [vmem:[%s1430 + $0x1c] sm:$0xf]
    %v1439 = vld [vmem:[%s1430 + $0x20] sm:$0xf]
    %v1440 = vld [vmem:[%s1430 + $0x24] sm:$0xf]
    %v1441 = vld [vmem:[%s1430 + $0x28] sm:$0xf]
    %v1442 = vld [vmem:[%s1430 + $0x2c] sm:$0xf]
    %v1443 = vld [vmem:[%s1430 + $0x30] sm:$0xf]
    %v1444 = vld [vmem:[%s1430 + $0x34] sm:$0xf]
    %v1445 = vld [vmem:[%s1430 + $0x38] sm:$0xf]
    %v1446 = vld [vmem:[%s1430 + $0x3c] sm:$0xf]
    %v1463 = vunpack.c.l.b16 %v1431
    %v1464 = vunpack.c.l.b16 %v1432
    %v1465 = vunpack.c.l.b16 %v1433
    %v1466 = vunpack.c.l.b16 %v1434
    %v1467 = vunpack.c.l.b16 %v1435
    %v1468 = vunpack.c.l.b16 %v1436
    %v1469 = vunpack.c.l.b16 %v1437
    %v1470 = vunpack.c.l.b16 %v1438
    %v1471 = vunpack.c.l.b16 %v1439
    %v1472 = vunpack.c.l.b16 %v1440
    %v1473 = vunpack.c.l.b16 %v1441
    %v1474 = vunpack.c.l.b16 %v1442
    %v1475 = vunpack.c.l.b16 %v1443
    %v1476 = vunpack.c.l.b16 %v1444
    %v1477 = vunpack.c.l.b16 %v1445
    %v1478 = vunpack.c.l.b16 %v1446
    %v1479 = vpack.c.b16 %v1464, %v1463
    %v1480 = vpack.c.b16 %v1466, %v1465
    %v1481 = vpack.c.b16 %v1468, %v1467
    %v1482 = vpack.c.b16 %v1470, %v1469
    %v1483 = vpack.c.b16 %v1472, %v1471
    %v1484 = vpack.c.b16 %v1474, %v1473
    %v1485 = vpack.c.b16 %v1476, %v1475
    %v1486 = vpack.c.b16 %v1478, %v1477
    %1495 = vmatprep.subr.bf16.mxu0 0
    %1496 = vmatpush1.bf16.msra.mxu0 %v1479
    %1497 = vmatprep.subr.bf16.mxu0 0
    %1498 = vmatpush1.bf16.msra.mxu0 %v1480
    %1499 = vmatprep.subr.bf16.mxu0 0
    %1500 = vmatpush1.bf16.msra.mxu0 %v1481
    %1501 = vmatprep.subr.bf16.mxu0 0
    %1502 = vmatpush1.bf16.msra.mxu0 %v1482
    %1503 = vmatprep.subr.bf16.mxu0 0
    %1504 = vmatpush1.bf16.msra.mxu0 %v1483
    %1505 = vmatprep.subr.bf16.mxu0 0
    %1506 = vmatpush1.bf16.msra.mxu0 %v1484
    %1507 = vmatprep.subr.bf16.mxu0 0
    %1508 = vmatpush1.bf16.msra.mxu0 %v1485
    %1509 = vmatprep.subr.bf16.mxu0 0
    %1510 = vmatpush1.bf16.msra.mxu0 %v1486
    %1511 = vmatprep.subr.bf16.mxu0 0
    %1512 = vmatpush1.bf16.msra.mxu0 0
    %1513 = vmatprep.subr.bf16.mxu0 0
    %1514 = vmatpush1.bf16.msra.mxu0 0
    %1515 = vmatprep.subr.bf16.mxu0 0
    %1516 = vmatpush1.bf16.msra.mxu0 0
    %1517 = vmatprep.subr.bf16.mxu0 0
    %1518 = vmatpush1.bf16.msra.mxu0 0
    %1519 = vmatprep.subr.bf16.mxu0 0
    %1520 = vmatpush1.bf16.msra.mxu0 0
    %1521 = vmatprep.subr.bf16.mxu0 0
    %1522 = vmatpush1.bf16.msra.mxu0 0
    %1523 = vmatprep.subr.bf16.mxu0 0
    %1524 = vmatpush1.bf16.msra.mxu0 0
    %1525 = vmatprep.subr.bf16.mxu0 0
    %1526 = vmatpush1.bf16.msra.mxu0 0
    %1527 = vmatprep.mubr.bf16.mxu0 0
    %1528 = vmatmul.mubr.bf16.gmra.mrb[0].mxu0 %v1429
    %v1529 = vpop.f32.mrb[0].mxu0
    %v1530 = vadd.f32 0.0, %v1529
    %v1531 = vpop.f32.mrb[0].mxu0
    %v1532 = vpop.f32.mrb[0].mxu0
    %v1533 = vadd.f32 0.0, %v1532
    %v1534 = vpop.f32.mrb[0].mxu0
    %1535 = vdwg.mxu0
    %v1536 = vpack.c.bf16 %v1533, %v1530
    %s1537 = scalar_lea.vmem %s3, 3
    %v1538 = vld [vmem:[%s1537] sm:$0x1]
    %1539 = vmatprep.subr.bf16.mxu0 0
    %1540 = vmatpush1.bf16.xpose.msra.mxu0 %v1536
    %1541 = vmatprep.subr.bf16.mxu0 0
    %1542 = vmatpush1.bf16.xpose.msra.mxu0 0
    %1543 = vmatprep.subr.bf16.mxu0 0
    %1544 = vmatpush1.bf16.xpose.msra.mxu0 0
    %1545 = vmatprep.subr.bf16.mxu0 0
    %1546 = vmatpush1.bf16.xpose.msra.mxu0 0
    %1547 = vmatprep.subr.bf16.mxu0 0
    %1548 = vmatpush1.bf16.xpose.msra.mxu0 0
    %1549 = vmatprep.subr.bf16.mxu0 0
    %1550 = vmatpush1.bf16.xpose.msra.mxu0 0
    %1551 = vmatprep.subr.bf16.mxu0 0
    %1552 = vmatpush1.bf16.xpose.msra.mxu0 0
    %1553 = vmatprep.subr.bf16.mxu0 0
    %1554 = vmatpush1.bf16.xpose.msra.mxu0 0
    %1555 = vmatprep.subr.bf16.mxu0 0
    %1556 = vmatpush1.bf16.xpose.msra.mxu0 0
    %1557 = vmatprep.subr.bf16.mxu0 0
    %1558 = vmatpush1.bf16.xpose.msra.mxu0 0
    %1559 = vmatprep.subr.bf16.mxu0 0
    %1560 = vmatpush1.bf16.xpose.msra.mxu0 0
    %1561 = vmatprep.subr.bf16.mxu0 0
    %1562 = vmatpush1.bf16.xpose.msra.mxu0 0
    %1563 = vmatprep.subr.bf16.mxu0 0
    %1564 = vmatpush1.bf16.xpose.msra.mxu0 0
    %1565 = vmatprep.subr.bf16.mxu0 0
    %1566 = vmatpush1.bf16.xpose.msra.mxu0 0
    %1567 = vmatprep.subr.bf16.mxu0 0
    %1568 = vmatpush1.bf16.xpose.msra.mxu0 0
    %1569 = vmatprep.subr.bf16.mxu0 0
    %1570 = vmatpush1.bf16.xpose.msra.mxu0 0
    %1571 = vmatprep.mubr.bf16.mxu0 0
    %1572 = vmatmul.mubr.bf16.gmra.mrb[0].mxu0 %v1538
    %v1573 = vpop.f32.mrb[0].mxu0
    %v1574 = vadd.f32 0.0, %v1573
    %v1575 = vpop.f32.mrb[0].mxu0
    %v1576 = vpop.f32.mrb[0].mxu0
    %v1577 = vpop.f32.mrb[0].mxu0
    %1578 = vdwg.mxu0
    %s1579 = scalar_lea.vmem [#allocation8], 3
    %v1580 = vld [vmem:[%s1579] sm:$0x1]
    %1581 = vmatprep.subr.bf16.mxu0 0
    %1582 = vmatpush1.bf16.xpose.msra.mxu0 %v1536
    %1583 = vmatprep.subr.bf16.mxu0 0
    %1584 = vmatpush1.bf16.xpose.msra.mxu0 0
    %1585 = vmatprep.subr.bf16.mxu0 0
    %1586 = vmatpush1.bf16.xpose.msra.mxu0 0
    %1587 = vmatprep.subr.bf16.mxu0 0
    %1588 = vmatpush1.bf16.xpose.msra.mxu0 0
    %1589 = vmatprep.subr.bf16.mxu0 0
    %1590 = vmatpush1.bf16.xpose.msra.mxu0 0
    %1591 = vmatprep.subr.bf16.mxu0 0
    %1592 = vmatpush1.bf16.xpose.msra.mxu0 0
    %1593 = vmatprep.subr.bf16.mxu0 0
    %1594 = vmatpush1.bf16.xpose.msra.mxu0 0
    %1595 = vmatprep.subr.bf16.mxu0 0
    %1596 = vmatpush1.bf16.xpose.msra.mxu0 0
    %1597 = vmatprep.subr.bf16.mxu0 0
    %1598 = vmatpush1.bf16.xpose.msra.mxu0 0
    %1599 = vmatprep.subr.bf16.mxu0 0
    %1600 = vmatpush1.bf16.xpose.msra.mxu0 0
    %1601 = vmatprep.subr.bf16.mxu0 0
    %1602 = vmatpush1.bf16.xpose.msra.mxu0 0
    %1603 = vmatprep.subr.bf16.mxu0 0
    %1604 = vmatpush1.bf16.xpose.msra.mxu0 0
    %1605 = vmatprep.subr.bf16.mxu0 0
    %1606 = vmatpush1.bf16.xpose.msra.mxu0 0
    %1607 = vmatprep.subr.bf16.mxu0 0
    %1608 = vmatpush1.bf16.xpose.msra.mxu0 0
    %1609 = vmatprep.subr.bf16.mxu0 0
    %1610 = vmatpush1.bf16.xpose.msra.mxu0 0
    %1611 = vmatprep.subr.bf16.mxu0 0
    %1612 = vmatpush1.bf16.xpose.msra.mxu0 0
    %1613 = vmatprep.mubr.bf16.mxu0 0
    %1614 = vmatmul.mubr.bf16.gmra.mrb[0].mxu0 %v1580
    %v1615 = vpop.f32.mrb[0].mxu0
    %v1616 = vadd.f32 0.0, %v1615
    %v1617 = vpop.f32.mrb[0].mxu0
    %v1618 = vpop.f32.mrb[0].mxu0
    %v1619 = vpop.f32.mrb[0].mxu0
    %1620 = vdwg.mxu0
    %v1621 = vlaneseq
    %v1622 = vshrl.u32 %v1621, 7
    %v1623 = vsub.s32 0, %v1622
    %v1624 = vrot.slane %v1616, %v1623
    %1626 = vbcast.lane.b32.xlu0 %v1624, 256
    %v1627 = vpop.permute.xlu0 %1626
    %s1629 = sor.u32 256, 8
    %1630 = vbcast.lane.b32.xlu0 %v1624, %s1629
    %v1631 = vpop.permute.xlu0 %1630
    %v1632 = vlaneseq
    %v1633 = vshrl.u32 %v1632, 7
    %v1634 = vsub.s32 1, %v1633
    %v1635 = vrot.slane %v1616, %v1634
    %1637 = vbcast.lane.b32.xlu0 %v1635, 256
    %v1638 = vpop.permute.xlu0 %1637
    %s1640 = sor.u32 256, 8
    %1641 = vbcast.lane.b32.xlu0 %v1635, %s1640
    %v1642 = vpop.permute.xlu0 %1641
    %v1645 = vunpack.c.l.s4 1966171168
    %v1646 = vunpack.c.0.s8 %v1645
    %v1647 = vlaneseq
    %v1648 = vshrl.u32 %v1647, 7
    %v1649 = vsub.s32 %v1646, %v1648
    %v1650 = vrot.slane %v1574, %v1649
    %v1651 = vcombine.high %v1650, %v1650
    %v1653 = vunpack.c.l.s4 1966171168
    %v1654 = vunpack.c.0.s8 %v1653
    %v1655 = vlaneseq
    %v1656 = vshrl.u32 %v1655, 7
    %v1657 = vsub.s32 %v1654, %v1656
    %v1658 = vrot.slane %v1650, %v1657
    %v1660 = vunpack.c.l.s4 1966171168
    %v1661 = vunpack.c.0.s8 %v1660
    %v1662 = vlaneseq
    %v1663 = vshrl.u32 %v1662, 7
    %v1664 = vsub.s32 %v1661, %v1663
    %v1665 = vrot.slane %v1651, %v1664
    %v1666 = vlaneseq
    %v1667 = vshrl.u32 %v1666, 7
    %v1668 = vsub.s32 0, %v1667
    %v1669 = vrot.slane %v1658, %v1668
    %v1670 = vlaneseq
    %v1671 = vshrl.u32 %v1670, 7
    %v1672 = vsub.s32 0, %v1671
    %v1673 = vrot.slane %v1665, %v1672
    %v1676 = vadd.f32 %v1627, %v1669
    %v1677 = vadd.f32 %v1631, %v1669
    %v1678 = vadd.f32 %v1638, %v1673
    %v1679 = vadd.f32 %v1642, %v1673
    %vm1680 = vcmp.gt.f32.partialorder %v1676, 0.0
    %vm1681 = vcmp.gt.f32.partialorder %v1677, 0.0
    %vm1682 = vcmp.gt.f32.partialorder %v1678, 0.0
    %vm1683 = vcmp.gt.f32.partialorder %v1679, 0.0
    %v1684 = vmul.f32 %v1676, 0.2
    %v1685 = vmul.f32 %v1677, 0.2
    %v1686 = vmul.f32 %v1678, 0.2
    %v1687 = vmul.f32 %v1679, 0.2
    %v1688 = vsel %vm1680, %v1676, %v1684
    %v1689 = vsel %vm1681, %v1677, %v1685
    %v1690 = vsel %vm1682, %v1678, %v1686
    %v1691 = vsel %vm1683, %v1679, %v1687
    %v1692 = vsel %vm374, %v1688, -1e+30
    %v1693 = vsel %vm375, %v1689, -1e+30
    %v1694 = vsel %vm374, %v1690, -1e+30
    %v1695 = vsel %vm375, %v1691, -1e+30
    %v1696 = vsel %vm380, %v1692, -inf
    %1697 = vmax.xlane.f32.xlu0 %v1696
    %v1698 = vpop.xlane.xlu0 %1697
    %v1699 = vsel %vm380, %v1693, -inf
    %1700 = vmax.xlane.f32.xlu0 %v1699
    %v1701 = vpop.xlane.xlu0 %1700
    %v1702 = vsel %vm380, %v1694, -inf
    %1703 = vmax.xlane.f32.xlu0 %v1702
    %v1704 = vpop.xlane.xlu0 %1703
    %v1705 = vsel %vm380, %v1695, -inf
    %1706 = vmax.xlane.f32.xlu0 %v1705
    %v1707 = vpop.xlane.xlu0 %1706
    %v1708 = vsub.f32 %v1692, %v1698
    %v1709 = vsub.f32 %v1693, %v1701
    %v1710 = vsub.f32 %v1694, %v1704
    %v1711 = vsub.f32 %v1695, %v1707
    %v1712 = vmul.f32 %v1708, 1.442695
    %v1713 = vpow.pop %v1712
    %v1714 = vmul.f32 %v1709, 1.442695
    %v1715 = vpow.pop %v1714
    %v1716 = vmul.f32 %v1710, 1.442695
    %v1717 = vpow.pop %v1716
    %v1718 = vmul.f32 %v1711, 1.442695
    %v1719 = vpow.pop %v1718
    %v1720 = vsel %vm380, %v1713, 0.0
    %1721 = vadd.xlane.f32.xlu0 %v1720
    %v1722 = vpop.xlane.xlu0 %1721
    %v1723 = vsel %vm380, %v1715, 0.0
    %1724 = vadd.xlane.f32.xlu0 %v1723
    %v1725 = vpop.xlane.xlu0 %1724
    %v1726 = vsel %vm380, %v1717, 0.0
    %1727 = vadd.xlane.f32.xlu0 %v1726
    %v1728 = vpop.xlane.xlu0 %1727
    %v1729 = vsel %vm380, %v1719, 0.0
    %1730 = vadd.xlane.f32.xlu0 %v1729
    %v1731 = vpop.xlane.xlu0 %1730
    %v1732 = vrcp.pop %v1722
    %v1733 = vrcp.pop %v1725
    %v1734 = vrcp.pop %v1728
    %v1735 = vrcp.pop %v1731
    %v1736 = vmul.f32 %v1713, %v1732
    %v1737 = vmul.f32 %v1715, %v1733
    %v1738 = vmul.f32 %v1717, %v1734
    %v1739 = vmul.f32 %v1719, %v1735
    %v1740 = vpack.c.bf16 %v1737, %v1736
    %v1741 = vpack.c.bf16 %v1739, %v1738
    %v1743 = vsel %vm380, %v1740, 0
    %1745 = vmatprep.subr.bf16.mxu0 0
    %1746 = vmatpush1.bf16.msra.mxu0 %v1536
    %1747 = vmatprep.subr.bf16.mxu0 0
    %1748 = vmatpush1.bf16.msra.mxu0 0
    %1749 = vmatprep.subr.bf16.mxu0 0
    %1750 = vmatpush1.bf16.msra.mxu0 0
    %1751 = vmatprep.subr.bf16.mxu0 0
    %1752 = vmatpush1.bf16.msra.mxu0 0
    %1753 = vmatprep.subr.bf16.mxu0 0
    %1754 = vmatpush1.bf16.msra.mxu0 0
    %1755 = vmatprep.subr.bf16.mxu0 0
    %1756 = vmatpush1.bf16.msra.mxu0 0
    %1757 = vmatprep.subr.bf16.mxu0 0
    %1758 = vmatpush1.bf16.msra.mxu0 0
    %1759 = vmatprep.subr.bf16.mxu0 0
    %1760 = vmatpush1.bf16.msra.mxu0 0
    %1761 = vmatprep.subr.bf16.mxu0 0
    %1762 = vmatpush1.bf16.msra.mxu0 0
    %1763 = vmatprep.subr.bf16.mxu0 0
    %1764 = vmatpush1.bf16.msra.mxu0 0
    %1765 = vmatprep.subr.bf16.mxu0 0
    %1766 = vmatpush1.bf16.msra.mxu0 0
    %1767 = vmatprep.subr.bf16.mxu0 0
    %1768 = vmatpush1.bf16.msra.mxu0 0
    %1769 = vmatprep.subr.bf16.mxu0 0
    %1770 = vmatpush1.bf16.msra.mxu0 0
    %1771 = vmatprep.subr.bf16.mxu0 0
    %1772 = vmatpush1.bf16.msra.mxu0 0
    %1773 = vmatprep.subr.bf16.mxu0 0
    %1774 = vmatpush1.bf16.msra.mxu0 0
    %1775 = vmatprep.subr.bf16.mxu0 0
    %1776 = vmatpush1.bf16.msra.mxu0 0
    %1777 = vmatprep.mubr.bf16.mxu0 0
    %1778 = vmatmul.mubr.bf16.gmra.mrb[0].mxu0 %v1743
    %v1779 = vpop.f32.mrb[0].mxu0
    %v1780 = vadd.f32 0.0, %v1779
    %v1781 = vpop.f32.mrb[0].mxu0
    %v1782 = vpop.f32.mrb[0].mxu0
    %v1783 = vadd.f32 0.0, %v1782
    %v1784 = vpop.f32.mrb[0].mxu0
    %1785 = vdwg.mxu0
    %v1787 = vsel %vm380, %v1741, 0
    %1789 = vmatprep.subr.bf16.mxu0 0
    %1790 = vmatpush1.bf16.msra.mxu0 %v1536
    %1791 = vmatprep.subr.bf16.mxu0 0
    %1792 = vmatpush1.bf16.msra.mxu0 0
    %1793 = vmatprep.subr.bf16.mxu0 0
    %1794 = vmatpush1.bf16.msra.mxu0 0
    %1795 = vmatprep.subr.bf16.mxu0 0
    %1796 = vmatpush1.bf16.msra.mxu0 0
    %1797 = vmatprep.subr.bf16.mxu0 0
    %1798 = vmatpush1.bf16.msra.mxu0 0
    %1799 = vmatprep.subr.bf16.mxu0 0
    %1800 = vmatpush1.bf16.msra.mxu0 0
    %1801 = vmatprep.subr.bf16.mxu0 0
    %1802 = vmatpush1.bf16.msra.mxu0 0
    %1803 = vmatprep.subr.bf16.mxu0 0
    %1804 = vmatpush1.bf16.msra.mxu0 0
    %1805 = vmatprep.subr.bf16.mxu0 0
    %1806 = vmatpush1.bf16.msra.mxu0 0
    %1807 = vmatprep.subr.bf16.mxu0 0
    %1808 = vmatpush1.bf16.msra.mxu0 0
    %1809 = vmatprep.subr.bf16.mxu0 0
    %1810 = vmatpush1.bf16.msra.mxu0 0
    %1811 = vmatprep.subr.bf16.mxu0 0
    %1812 = vmatpush1.bf16.msra.mxu0 0
    %1813 = vmatprep.subr.bf16.mxu0 0
    %1814 = vmatpush1.bf16.msra.mxu0 0
    %1815 = vmatprep.subr.bf16.mxu0 0
    %1816 = vmatpush1.bf16.msra.mxu0 0
    %1817 = vmatprep.subr.bf16.mxu0 0
    %1818 = vmatpush1.bf16.msra.mxu0 0
    %1819 = vmatprep.subr.bf16.mxu0 0
    %1820 = vmatpush1.bf16.msra.mxu0 0
    %1821 = vmatprep.mubr.bf16.mxu0 0
    %1822 = vmatmul.mubr.bf16.gmra.mrb[0].mxu0 %v1787
    %v1823 = vpop.f32.mrb[0].mxu0
    %v1824 = vadd.f32 0.0, %v1823
    %v1825 = vpop.f32.mrb[0].mxu0
    %v1826 = vpop.f32.mrb[0].mxu0
    %v1827 = vadd.f32 0.0, %v1826
    %v1828 = vpop.f32.mrb[0].mxu0
    %1829 = vdwg.mxu0
    %s1830 = scalar_lea.vmem %s6, 6
    %v1831 = vld [vmem:[%s1830] sm:$0x3]
    %v1832 = vlaneseq
    %v1833 = vshrl.u32 %v1832, 7
    %v1834 = vsub.s32 0, %v1833
    %v1835 = vrot.slane %v1831, %v1834
    %v1836 = vmul.f32 %v1780, %v1835
    %v1837 = vmul.f32 %v1783, %v1835
    %v1838 = vlaneseq
    %v1839 = vshrl.u32 %v1838, 7
    %v1840 = vsub.s32 1, %v1839
    %v1841 = vrot.slane %v1831, %v1840
    %v1842 = vmul.f32 %v1824, %v1841
    %v1843 = vmul.f32 %v1827, %v1841
    %v1844 = vadd.f32 %v1836, %v1842
    %v1845 = vadd.f32 %v1837, %v1843
    %s1846 = scalar_lea.vmem %s5, 3
    %v1847 = vld [vmem:[%s1846] sm:$0x1]
    %v1849 = vlaneseq
    %v1850 = vshrl.u32 %v1849, 7
    %v1851 = vsub.s32 0, %v1850
    %v1852 = vrot.slane %v1847, %v1851
    %v1854 = vadd.f32 %v1844, %v1852
    %v1855 = vadd.f32 %v1845, %v1852
    %vm1856 = vcmp.gt.f32.partialorder %v1854, 0.0
    %vm1857 = vcmp.gt.f32.partialorder %v1855, 0.0
    %v1858 = vmin.f32 %v1854, 0.0
    %v1859 = vmin.f32 %v1855, 0.0
    %v1860 = vmul.f32 %v1858, 1.442695
    %v1861 = vpow.pop %v1860
    %v1862 = vmul.f32 %v1859, 1.442695
    %v1863 = vpow.pop %v1862
    %v1864 = vsub.f32 %v1861, 1.0
    %v1865 = vsub.f32 %v1863, 1.0
    %v1866 = vsel %vm1856, %v1854, %v1864
    %v1867 = vsel %vm1857, %v1855, %v1865
    %v1868 = vpack.c.bf16 %v1867, %v1866
    %v1869 = vld [vmem:[#allocation10] sm:$0xf]
    %v1870 = vld [vmem:[#allocation10 + $0x4] sm:$0xf]
    %v1871 = vld [vmem:[#allocation10 + $0x8] sm:$0xf]
    %v1872 = vld [vmem:[#allocation10 + $0xc] sm:$0xf]
    %v1873 = vld [vmem:[#allocation10 + $0x10] sm:$0xf]
    %v1874 = vld [vmem:[#allocation10 + $0x14] sm:$0xf]
    %v1875 = vld [vmem:[#allocation10 + $0x18] sm:$0xf]
    %v1876 = vld [vmem:[#allocation10 + $0x1c] sm:$0xf]
    %v1877 = vld [vmem:[#allocation10 + $0x20] sm:$0xf]
    %v1878 = vld [vmem:[#allocation10 + $0x24] sm:$0xf]
    %v1879 = vld [vmem:[#allocation10 + $0x28] sm:$0xf]
    %v1880 = vld [vmem:[#allocation10 + $0x2c] sm:$0xf]
    %v1881 = vld [vmem:[#allocation10 + $0x30] sm:$0xf]
    %v1882 = vld [vmem:[#allocation10 + $0x34] sm:$0xf]
    %v1883 = vld [vmem:[#allocation10 + $0x38] sm:$0xf]
    %v1884 = vld [vmem:[#allocation10 + $0x3c] sm:$0xf]
    %v1885 = vld [vmem:[%s8] sm:$0x1]
    %v1887 = vlaneseq
    %v1888 = vshrl.u32 %v1887, 7
    %v1889 = vsub.s32 0, %v1888
    %v1890 = vrot.slane %v1885, %v1889
    %v1908 = vunpack.c.l.b16 %v1869
    %v1909 = vunpack.c.l.b16 %v1870
    %v1910 = vunpack.c.l.b16 %v1871
    %v1911 = vunpack.c.l.b16 %v1872
    %v1912 = vunpack.c.l.b16 %v1873
    %v1913 = vunpack.c.l.b16 %v1874
    %v1914 = vunpack.c.l.b16 %v1875
    %v1915 = vunpack.c.l.b16 %v1876
    %v1916 = vunpack.c.l.b16 %v1877
    %v1917 = vunpack.c.l.b16 %v1878
    %v1918 = vunpack.c.l.b16 %v1879
    %v1919 = vunpack.c.l.b16 %v1880
    %v1920 = vunpack.c.l.b16 %v1881
    %v1921 = vunpack.c.l.b16 %v1882
    %v1922 = vunpack.c.l.b16 %v1883
    %v1923 = vunpack.c.l.b16 %v1884
    %v1924 = vpack.c.b16 %v1909, %v1908
    %v1925 = vpack.c.b16 %v1911, %v1910
    %v1926 = vpack.c.b16 %v1913, %v1912
    %v1927 = vpack.c.b16 %v1915, %v1914
    %v1928 = vpack.c.b16 %v1917, %v1916
    %v1929 = vpack.c.b16 %v1919, %v1918
    %v1930 = vpack.c.b16 %v1921, %v1920
    %v1931 = vpack.c.b16 %v1923, %v1922
    %1940 = vmatprep.subr.bf16.mxu0 0
    %1941 = vmatpush1.bf16.msra.mxu0 %v1924
    %1942 = vmatprep.subr.bf16.mxu0 0
    %1943 = vmatpush1.bf16.msra.mxu0 %v1925
    %1944 = vmatprep.subr.bf16.mxu0 0
    %1945 = vmatpush1.bf16.msra.mxu0 %v1926
    %1946 = vmatprep.subr.bf16.mxu0 0
    %1947 = vmatpush1.bf16.msra.mxu0 %v1927
    %1948 = vmatprep.subr.bf16.mxu0 0
    %1949 = vmatpush1.bf16.msra.mxu0 %v1928
    %1950 = vmatprep.subr.bf16.mxu0 0
    %1951 = vmatpush1.bf16.msra.mxu0 %v1929
    %1952 = vmatprep.subr.bf16.mxu0 0
    %1953 = vmatpush1.bf16.msra.mxu0 %v1930
    %1954 = vmatprep.subr.bf16.mxu0 0
    %1955 = vmatpush1.bf16.msra.mxu0 %v1931
    %1956 = vmatprep.subr.bf16.mxu0 0
    %1957 = vmatpush1.bf16.msra.mxu0 0
    %1958 = vmatprep.subr.bf16.mxu0 0
    %1959 = vmatpush1.bf16.msra.mxu0 0
    %1960 = vmatprep.subr.bf16.mxu0 0
    %1961 = vmatpush1.bf16.msra.mxu0 0
    %1962 = vmatprep.subr.bf16.mxu0 0
    %1963 = vmatpush1.bf16.msra.mxu0 0
    %1964 = vmatprep.subr.bf16.mxu0 0
    %1965 = vmatpush1.bf16.msra.mxu0 0
    %1966 = vmatprep.subr.bf16.mxu0 0
    %1967 = vmatpush1.bf16.msra.mxu0 0
    %1968 = vmatprep.subr.bf16.mxu0 0
    %1969 = vmatpush1.bf16.msra.mxu0 0
    %1970 = vmatprep.subr.bf16.mxu0 0
    %1971 = vmatpush1.bf16.msra.mxu0 0
    %1972 = vmatprep.mubr.bf16.mxu0 0
    %1973 = vmatmul.mubr.bf16.gmra.mrb[0].mxu0 %v1868
    %v1974 = vpop.f32.mrb[0].mxu0
    %v1975 = vadd.f32 %v1890, %v1974
    %v1976 = vpop.f32.mrb[0].mxu0
    %v1977 = vpop.f32.mrb[0].mxu0
    %v1978 = vadd.f32 %v1890, %v1977
    %v1979 = vpop.f32.mrb[0].mxu0
    %1980 = vdwg.mxu0
    %v1981 = vmax.f32 %v1975, 0.0
    %v1982 = vmax.f32 %v1978, 0.0
    %v1983 = vpack.c.bf16 %v1982, %v1981
    %s1984 = scalar_lea.vmem [#allocation10], 64
    %v1985 = vld [vmem:[%s1984] sm:$0xf]
    %v1986 = vld [vmem:[%s1984 + $0x4] sm:$0xf]
    %v1987 = vld [vmem:[%s1984 + $0x8] sm:$0xf]
    %v1988 = vld [vmem:[%s1984 + $0xc] sm:$0xf]
    %v1989 = vld [vmem:[%s1984 + $0x10] sm:$0xf]
    %v1990 = vld [vmem:[%s1984 + $0x14] sm:$0xf]
    %v1991 = vld [vmem:[%s1984 + $0x18] sm:$0xf]
    %v1992 = vld [vmem:[%s1984 + $0x1c] sm:$0xf]
    %v1993 = vld [vmem:[%s1984 + $0x20] sm:$0xf]
    %v1994 = vld [vmem:[%s1984 + $0x24] sm:$0xf]
    %v1995 = vld [vmem:[%s1984 + $0x28] sm:$0xf]
    %v1996 = vld [vmem:[%s1984 + $0x2c] sm:$0xf]
    %v1997 = vld [vmem:[%s1984 + $0x30] sm:$0xf]
    %v1998 = vld [vmem:[%s1984 + $0x34] sm:$0xf]
    %v1999 = vld [vmem:[%s1984 + $0x38] sm:$0xf]
    %v2000 = vld [vmem:[%s1984 + $0x3c] sm:$0xf]
    %s2001 = scalar_lea.vmem %s8, 1
    %v2002 = vld [vmem:[%s2001] sm:$0x1]
    %v2004 = vlaneseq
    %v2005 = vshrl.u32 %v2004, 7
    %v2006 = vsub.s32 0, %v2005
    %v2007 = vrot.slane %v2002, %v2006
    %v2025 = vunpack.c.l.b16 %v1985
    %v2026 = vunpack.c.l.b16 %v1986
    %v2027 = vunpack.c.l.b16 %v1987
    %v2028 = vunpack.c.l.b16 %v1988
    %v2029 = vunpack.c.l.b16 %v1989
    %v2030 = vunpack.c.l.b16 %v1990
    %v2031 = vunpack.c.l.b16 %v1991
    %v2032 = vunpack.c.l.b16 %v1992
    %v2033 = vunpack.c.l.b16 %v1993
    %v2034 = vunpack.c.l.b16 %v1994
    %v2035 = vunpack.c.l.b16 %v1995
    %v2036 = vunpack.c.l.b16 %v1996
    %v2037 = vunpack.c.l.b16 %v1997
    %v2038 = vunpack.c.l.b16 %v1998
    %v2039 = vunpack.c.l.b16 %v1999
    %v2040 = vunpack.c.l.b16 %v2000
    %v2041 = vpack.c.b16 %v2026, %v2025
    %v2042 = vpack.c.b16 %v2028, %v2027
    %v2043 = vpack.c.b16 %v2030, %v2029
    %v2044 = vpack.c.b16 %v2032, %v2031
    %v2045 = vpack.c.b16 %v2034, %v2033
    %v2046 = vpack.c.b16 %v2036, %v2035
    %v2047 = vpack.c.b16 %v2038, %v2037
    %v2048 = vpack.c.b16 %v2040, %v2039
    %2057 = vmatprep.subr.bf16.mxu0 0
    %2058 = vmatpush1.bf16.msra.mxu0 %v2041
    %2059 = vmatprep.subr.bf16.mxu0 0
    %2060 = vmatpush1.bf16.msra.mxu0 %v2042
    %2061 = vmatprep.subr.bf16.mxu0 0
    %2062 = vmatpush1.bf16.msra.mxu0 %v2043
    %2063 = vmatprep.subr.bf16.mxu0 0
    %2064 = vmatpush1.bf16.msra.mxu0 %v2044
    %2065 = vmatprep.subr.bf16.mxu0 0
    %2066 = vmatpush1.bf16.msra.mxu0 %v2045
    %2067 = vmatprep.subr.bf16.mxu0 0
    %2068 = vmatpush1.bf16.msra.mxu0 %v2046
    %2069 = vmatprep.subr.bf16.mxu0 0
    %2070 = vmatpush1.bf16.msra.mxu0 %v2047
    %2071 = vmatprep.subr.bf16.mxu0 0
    %2072 = vmatpush1.bf16.msra.mxu0 %v2048
    %2073 = vmatprep.subr.bf16.mxu0 0
    %2074 = vmatpush1.bf16.msra.mxu0 0
    %2075 = vmatprep.subr.bf16.mxu0 0
    %2076 = vmatpush1.bf16.msra.mxu0 0
    %2077 = vmatprep.subr.bf16.mxu0 0
    %2078 = vmatpush1.bf16.msra.mxu0 0
    %2079 = vmatprep.subr.bf16.mxu0 0
    %2080 = vmatpush1.bf16.msra.mxu0 0
    %2081 = vmatprep.subr.bf16.mxu0 0
    %2082 = vmatpush1.bf16.msra.mxu0 0
    %2083 = vmatprep.subr.bf16.mxu0 0
    %2084 = vmatpush1.bf16.msra.mxu0 0
    %2085 = vmatprep.subr.bf16.mxu0 0
    %2086 = vmatpush1.bf16.msra.mxu0 0
    %2087 = vmatprep.subr.bf16.mxu0 0
    %2088 = vmatpush1.bf16.msra.mxu0 0
    %2089 = vmatprep.mubr.bf16.mxu0 0
    %2090 = vmatmul.mubr.bf16.gmra.mrb[0].mxu0 %v1983
    %v2091 = vpop.f32.mrb[0].mxu0
    %v2092 = vadd.f32 %v2007, %v2091
    %v2093 = vpop.f32.mrb[0].mxu0
    %v2094 = vpop.f32.mrb[0].mxu0
    %v2095 = vadd.f32 %v2007, %v2094
    %v2096 = vpop.f32.mrb[0].mxu0
    %2097 = vdwg.mxu0
    %v2098 = vmax.f32 %v2092, 0.0
    %v2099 = vmax.f32 %v2095, 0.0
    %v2100 = vpack.c.bf16 %v2099, %v2098
    %s2101 = scalar_lea.vmem [#allocation10], 128
    %v2102 = vld [vmem:[%s2101] sm:$0xf]
    %v2103 = vld [vmem:[%s2101 + $0x4] sm:$0xf]
    %v2104 = vld [vmem:[%s2101 + $0x8] sm:$0xf]
    %v2105 = vld [vmem:[%s2101 + $0xc] sm:$0xf]
    %v2106 = vld [vmem:[%s2101 + $0x10] sm:$0xf]
    %v2107 = vld [vmem:[%s2101 + $0x14] sm:$0xf]
    %v2108 = vld [vmem:[%s2101 + $0x18] sm:$0xf]
    %v2109 = vld [vmem:[%s2101 + $0x1c] sm:$0xf]
    %v2110 = vld [vmem:[%s2101 + $0x20] sm:$0xf]
    %v2111 = vld [vmem:[%s2101 + $0x24] sm:$0xf]
    %v2112 = vld [vmem:[%s2101 + $0x28] sm:$0xf]
    %v2113 = vld [vmem:[%s2101 + $0x2c] sm:$0xf]
    %v2114 = vld [vmem:[%s2101 + $0x30] sm:$0xf]
    %v2115 = vld [vmem:[%s2101 + $0x34] sm:$0xf]
    %v2116 = vld [vmem:[%s2101 + $0x38] sm:$0xf]
    %v2117 = vld [vmem:[%s2101 + $0x3c] sm:$0xf]
    %s2118 = scalar_lea.vmem %s8, 2
    %v2119 = vld [vmem:[%s2118] sm:$0x1]
    %v2121 = vlaneseq
    %v2122 = vshrl.u32 %v2121, 7
    %v2123 = vsub.s32 0, %v2122
    %v2124 = vrot.slane %v2119, %v2123
    %v2142 = vunpack.c.l.b16 %v2102
    %v2143 = vunpack.c.l.b16 %v2103
    %v2144 = vunpack.c.l.b16 %v2104
    %v2145 = vunpack.c.l.b16 %v2105
    %v2146 = vunpack.c.l.b16 %v2106
    %v2147 = vunpack.c.l.b16 %v2107
    %v2148 = vunpack.c.l.b16 %v2108
    %v2149 = vunpack.c.l.b16 %v2109
    %v2150 = vunpack.c.l.b16 %v2110
    %v2151 = vunpack.c.l.b16 %v2111
    %v2152 = vunpack.c.l.b16 %v2112
    %v2153 = vunpack.c.l.b16 %v2113
    %v2154 = vunpack.c.l.b16 %v2114
    %v2155 = vunpack.c.l.b16 %v2115
    %v2156 = vunpack.c.l.b16 %v2116
    %v2157 = vunpack.c.l.b16 %v2117
    %v2158 = vpack.c.b16 %v2143, %v2142
    %v2159 = vpack.c.b16 %v2145, %v2144
    %v2160 = vpack.c.b16 %v2147, %v2146
    %v2161 = vpack.c.b16 %v2149, %v2148
    %v2162 = vpack.c.b16 %v2151, %v2150
    %v2163 = vpack.c.b16 %v2153, %v2152
    %v2164 = vpack.c.b16 %v2155, %v2154
    %v2165 = vpack.c.b16 %v2157, %v2156
    %2174 = vmatprep.subr.bf16.mxu0 0
    %2175 = vmatpush1.bf16.msra.mxu0 %v2158
    %2176 = vmatprep.subr.bf16.mxu0 0
    %2177 = vmatpush1.bf16.msra.mxu0 %v2159
    %2178 = vmatprep.subr.bf16.mxu0 0
    %2179 = vmatpush1.bf16.msra.mxu0 %v2160
    %2180 = vmatprep.subr.bf16.mxu0 0
    %2181 = vmatpush1.bf16.msra.mxu0 %v2161
    %2182 = vmatprep.subr.bf16.mxu0 0
    %2183 = vmatpush1.bf16.msra.mxu0 %v2162
    %2184 = vmatprep.subr.bf16.mxu0 0
    %2185 = vmatpush1.bf16.msra.mxu0 %v2163
    %2186 = vmatprep.subr.bf16.mxu0 0
    %2187 = vmatpush1.bf16.msra.mxu0 %v2164
    %2188 = vmatprep.subr.bf16.mxu0 0
    %2189 = vmatpush1.bf16.msra.mxu0 %v2165
    %2190 = vmatprep.subr.bf16.mxu0 0
    %2191 = vmatpush1.bf16.msra.mxu0 0
    %2192 = vmatprep.subr.bf16.mxu0 0
    %2193 = vmatpush1.bf16.msra.mxu0 0
    %2194 = vmatprep.subr.bf16.mxu0 0
    %2195 = vmatpush1.bf16.msra.mxu0 0
    %2196 = vmatprep.subr.bf16.mxu0 0
    %2197 = vmatpush1.bf16.msra.mxu0 0
    %2198 = vmatprep.subr.bf16.mxu0 0
    %2199 = vmatpush1.bf16.msra.mxu0 0
    %2200 = vmatprep.subr.bf16.mxu0 0
    %2201 = vmatpush1.bf16.msra.mxu0 0
    %2202 = vmatprep.subr.bf16.mxu0 0
    %2203 = vmatpush1.bf16.msra.mxu0 0
    %2204 = vmatprep.subr.bf16.mxu0 0
    %2205 = vmatpush1.bf16.msra.mxu0 0
    %2206 = vmatprep.mubr.bf16.mxu0 0
    %2207 = vmatmul.mubr.bf16.gmra.mrb[0].mxu0 %v2100
    %v2208 = vpop.f32.mrb[0].mxu0
    %v2209 = vadd.f32 %v2124, %v2208
    %v2210 = vpop.f32.mrb[0].mxu0
    %v2211 = vpop.f32.mrb[0].mxu0
    %v2212 = vadd.f32 %v2124, %v2211
    %v2213 = vpop.f32.mrb[0].mxu0
    %2214 = vdwg.mxu0
    %v2215 = vsub.f32 0.0, %v2209
    %v2216 = vsub.f32 0.0, %v2212
    %v2217 = vmul.f32 %v2215, 1.442695
    %v2218 = vpow.pop %v2217
    %v2219 = vmul.f32 %v2216, 1.442695
    %v2220 = vpow.pop %v2219
    %v2221 = vadd.f32 %v2218, 1.0
    %v2222 = vadd.f32 %v2220, 1.0
    %v2223 = vrcp.pop %v2221
    %v2224 = vrcp.pop %v2222
    %2225 = vst [vmem:[#allocation11] sm:$0xff] %v2223
    %2226 = vst [vmem:[#allocation11 + $0x8] sm:$0xff] %v2224
    // Predicated region
    $region58: #{tpu_custom_call.1} parent=1 // pred_check
      _
    $region59: #{tpu_custom_call.1} parent=1 // pred_check_branch
      %2228 = sbr.rel (0) target = $region61
    $region60: #{tpu_custom_call.1} parent=1 // pred_region
      %s2230 = ssub.s32 256, 256
      %2231 = vsyncadd [#allocation4], %s2230
      %s2232 = sshll.u32 [#allocation11], 4
      %s2233 = int_to_ptr.vmem [resolvable:$true] %s2232
      %2238 = dma.vmem_to_hbm [thread:$0]  %s2233, 256, %s9, [#allocation4], 128, 128, 8
    $region61: #{tpu_custom_call.1} parent=1 // pred_fallthru
      _
    // Predicated region
    $region62: #{tpu_custom_call.1} parent=1 // pred_check
      _
    $region63: #{tpu_custom_call.1} parent=1 // pred_check_branch
      %2240 = sbr.rel (0) target = $region65
    $region64: #{tpu_custom_call.1} parent=1 // pred_region
      %2241 = dma.done [#allocation4], 256
    $region65: #{tpu_custom_call.1} parent=1 // pred_fallthru
      _
    %2242 = vsyncpa [#allocation3], 1
    %2243 = vsyncpa [#allocation6], 1
    %2244 = vsyncpa [#allocation9], 1
    %2245 = vsyncpa [#allocation4], 1

</llo_original>
